<compile_context>
chip_gen: v6e
topology: v6e:2x2x1
jax: 0.10.0
libtpu: 0.0.40
codegen_flags: <defaults>
</compile_context>

<pallas_src>
import jax
import jax.numpy as jnp
from jax.experimental import pallas as pl
from jax.experimental.pallas import tpu as pltpu


def _sigmoid(x):
    # Exact sigmoid via tanh (single EUP transcendental, no VPU divide chain).
    return 0.5 * (jnp.tanh(0.5 * x) + 1.0)


def double_kernel(x1_ref, x2_ref, w_ref, sh_ref, o1_ref, o2_ref):
    """Fused Double forward on one (batch-block, spatial-tile) block.

    x1_ref/x2_ref : (Bn, C, T) f32, channels on sublanes, pixels on lanes
    w_ref         : (4, C, C)  BN-scale-folded weights [fc1, fc2, conv1, conv2]
    sh_ref        : (4, C, 1)  folded BatchNorm shifts
    o1_ref/o2_ref : (Bn, C, T) outputs
    """
    Bn = x1_ref.shape[0]

    # Hoist the small weight/shift loads out of the per-image loop.
    w_fc1 = w_ref[0]
    w_fc2 = w_ref[1]
    w_c1 = w_ref[2]
    w_c2 = w_ref[3]
    sh_fc1 = sh_ref[0]
    sh_fc2 = sh_ref[1]
    sh_c1 = sh_ref[2]
    sh_c2 = sh_ref[3]

    for b in range(Bn):  # Bn is a small static constant (unrolled)
        # Stage 1: 1x1 conv (as matmul) + folded BN + ReLU, per branch.
        a1 = jnp.maximum(
            jnp.dot(w_fc1, x1_ref[b], preferred_element_type=jnp.float32)
            + sh_fc1, 0.0)
        a2 = jnp.maximum(
            jnp.dot(w_fc2, x2_ref[b], preferred_element_type=jnp.float32)
            + sh_fc2, 0.0)

        # Sigmoid gating.
        s1 = _sigmoid(a1)
        s2 = _sigmoid(a2)
        g = s1 * s2
        y1 = a1 * (1.0 + s1) + g * a2
        y2 = a2 * (1.0 + s2) + g * y1  # uses the *updated* x1, as in PyTorch

        # Stage 2: 1x1 conv + folded BN + ReLU, per branch.
        o1_ref[b] = jnp.maximum(
            jnp.dot(w_c1, y1, preferred_element_type=jnp.float32) + sh_c1, 0.0)
        o2_ref[b] = jnp.maximum(
            jnp.dot(w_c2, y2, preferred_element_type=jnp.float32) + sh_c2, 0.0)


def _choose_blocks(N, C, HW):
    """Pick (padded HW, spatial tile T, batch block Bn).

    T: largest multiple-of-128 divisor of the padded extent, capped at 4096.
    Bn: largest divisor of N with a <= ~1 MiB per-array block, keeping at
        least 2 grid steps when there is enough work (feeds both v7x TCs).
    """
    HW_pad = ((HW + 127) // 128) * 128
    m = HW_pad // 128
    cap = min(m, 32)  # 32 * 128 = 4096 lanes per tile
    d = 1
    for cand in range(cap, 0, -1):
        if m % cand == 0:
            d = cand
            break
    T = 128 * d

    n_hw = HW_pad // T
    max_block_elems = (1 << 20) // 4  # ~1 MiB f32 per (Bn, C, T) block
    Bn = 1
    for cand in range(N, 0, -1):
        if N % cand != 0:
            continue
        if cand * C * T > max_block_elems:
            continue
        if (N // cand) * n_hw < 2 and N * n_hw >= 2:
            continue  # don't collapse the grid to a single step
        Bn = cand
        break
    return HW_pad, T, Bn


def fold_params(w, scale, shift):
    """Fold eval-mode BN scale into the conv weight rows.

    w: (4, C, C) in PyTorch (Cout, Cin) order for [fc1, fc2, conv1, conv2]
    scale/shift: (4, C)
    Returns ((4, C, C) scale-folded weights, (4, C, 1) shifts).
    """
    wf = (w * scale[:, :, None]).astype(jnp.float32)
    return wf, shift[..., None].astype(jnp.float32)


@jax.jit
def double_forward(x1, x2, w, scale, shift):
    """x1/x2: (N, C, H, W) f32 NCHW.  Returns (out1, out2) as NCHW."""
    N, C, H, W = x1.shape
    HW = H * W
    HW_pad, T, Bn = _choose_blocks(N, C, HW)

    wf, shf = fold_params(w, scale, shift)

    # Free reshape (contiguous); pad spatial extent to a multiple of 128 so
    # every store is a full-lane (unmasked) vst.  Pad is sliced off below.
    r1 = x1.reshape(N, C, HW)
    r2 = x2.reshape(N, C, HW)
    if HW_pad != HW:
        pad = ((0, 0), (0, 0), (0, HW_pad - HW))
        r1 = jnp.pad(r1, pad)
        r2 = jnp.pad(r2, pad)

    grid = (N // Bn, HW_pad // T)
    x_spec = pl.BlockSpec((Bn, C, T), lambda n, p: (n, 0, p))
    w_spec = pl.BlockSpec((4, C, C), lambda n, p: (0, 0, 0))
    s_spec = pl.BlockSpec((4, C, 1), lambda n, p: (0, 0, 0))

    out1, out2 = pl.pallas_call(
        double_kernel,
        out_shape=(jax.ShapeDtypeStruct((N, C, HW_pad), jnp.float32),
                   jax.ShapeDtypeStruct((N, C, HW_pad), jnp.float32)),
        grid_spec=pltpu.PrefetchScalarGridSpec(
            num_scalar_prefetch=0,
            grid=grid,
            in_specs=[x_spec, x_spec, w_spec, s_spec],
            out_specs=[x_spec, x_spec]),
        compiler_params=pltpu.CompilerParams(
            dimension_semantics=("parallel", "parallel"),
            vmem_limit_bytes=48 * 1024 * 1024),
    )(r1, r2, wf, shf)

    out1 = out1[:, :, :HW].reshape(N, C, H, W)
    out2 = out2[:, :, :HW].reshape(N, C, H, W)
    return out1, out2


def reference_forward(x1, x2, w, scale, shift):
    """Pure-JAX reference with the module's math, NCHW in/out."""
    def cbr(x, k):
        y = jnp.einsum('oc,nchw->nohw', w[k], x)
        y = y * scale[k][None, :, None, None] + shift[k][None, :, None, None]
        return jnp.maximum(y, 0.0)

    a1 = cbr(x1, 0)
    a2 = cbr(x2, 1)
    s1 = _sigmoid(a1)
    s2 = _sigmoid(a2)
    y1 = a1 + a1 * s1 + s1 * s2 * a2
    y2 = a2 + a2 * s2 + s2 * s1 * y1
    return cbr(y1, 2), cbr(y2, 3)


if __name__ == "__main__":
    # Shapes consistent with the module: input_dim = 64 channels.
    N, C, H, W = 2, 64, 16, 16
    key = jax.random.PRNGKey(0)
    k_x1, k_x2, k_w, k_g, k_b, k_m, k_v = jax.random.split(key, 7)

    x1 = jax.random.normal(k_x1, (N, C, H, W), jnp.float32)
    x2 = jax.random.normal(k_x2, (N, C, H, W), jnp.float32)

    # Conv weights in PyTorch (Cout, Cin) order: [fc1, fc2, conv1, conv2].
    w = jax.random.normal(k_w, (4, C, C), jnp.float32) * (1.0 / jnp.sqrt(C))

    # Eval-mode BatchNorm folded to per-channel scale/shift:
    #   scale = gamma / sqrt(var + eps),  shift = beta - mean * scale
    eps = 1e-5
    gamma = 1.0 + 0.1 * jax.random.normal(k_g, (4, C), jnp.float32)
    beta = 0.1 * jax.random.normal(k_b, (4, C), jnp.float32)
    r_mean = 0.1 * jax.random.normal(k_m, (4, C), jnp.float32)
    r_var = jnp.abs(jax.random.normal(k_v, (4, C), jnp.float32)) + 0.5
    scale = gamma / jnp.sqrt(r_var + eps)
    shift = beta - r_mean * scale

    out1, out2 = double_forward(x1, x2, w, scale, shift)
    out1, out2 = jax.block_until_ready((out1, out2))

    ref1, ref2 = reference_forward(x1, x2, w, scale, shift)
    assert out1.shape == (N, C, H, W) and out2.shape == (N, C, H, W)
    assert jnp.allclose(out1, ref1, rtol=1e-4, atol=1e-4), \
        float(jnp.max(jnp.abs(out1 - ref1)))
    assert jnp.allclose(out2, ref2, rtol=1e-4, atol=1e-4), \
        float(jnp.max(jnp.abs(out2 - ref2)))

    print("KERNEL_OK")
</pallas_src>

<mosaic_0001>
module attributes {stable_mosaic.version = 11 : i64} {
  func.func @double_kernel(%arg0: i32, %arg1: i32, %arg2: memref<1x64x256xf32, #tpu.memory_space<vmem>>, %arg3: memref<1x64x256xf32, #tpu.memory_space<vmem>>, %arg4: memref<4x64x64xf32, #tpu.memory_space<vmem>>, %arg5: memref<4x64x1xf32, #tpu.memory_space<vmem>>, %arg6: memref<1x64x256xf32, #tpu.memory_space<vmem>>, %arg7: memref<1x64x256xf32, #tpu.memory_space<vmem>>) attributes {dimension_semantics = [#tpu.dimension_semantics<parallel>, #tpu.dimension_semantics<parallel>], iteration_bounds = array<i64: 2, 1>, scalar_prefetch = 0 : i64, scratch_operands = 0 : i64, tpu.core_type = #tpu.core_type<tc>, window_params = [{transform_indices = @transform_0, window_bounds = array<i64: 1, 64, 256>}, {transform_indices = @transform_1, window_bounds = array<i64: 1, 64, 256>}, {pipeline_mode = #tpu.pipeline_mode<synchronous>, transform_indices = @transform_2, window_bounds = array<i64: 4, 64, 64>}, {pipeline_mode = #tpu.pipeline_mode<synchronous>, transform_indices = @transform_3, window_bounds = array<i64: 4, 64, 1>}, {transform_indices = @transform_4, window_bounds = array<i64: 1, 64, 256>}, {transform_indices = @transform_5, window_bounds = array<i64: 1, 64, 256>}]} {
    %c0 = arith.constant 0 : index
    %c0_0 = arith.constant 0 : index
    %c0_1 = arith.constant 0 : index
    %0 = vector.load %arg4[%c0, %c0_0, %c0_1] : memref<4x64x64xf32, #tpu.memory_space<vmem>>, vector<1x64x64xf32>
    %1 = vector.shape_cast %0 : vector<1x64x64xf32> to vector<64x64xf32>
    %c1 = arith.constant 1 : index
    %c0_2 = arith.constant 0 : index
    %c0_3 = arith.constant 0 : index
    %2 = vector.load %arg4[%c1, %c0_2, %c0_3] : memref<4x64x64xf32, #tpu.memory_space<vmem>>, vector<1x64x64xf32>
    %3 = vector.shape_cast %2 : vector<1x64x64xf32> to vector<64x64xf32>
    %c2 = arith.constant 2 : index
    %c0_4 = arith.constant 0 : index
    %c0_5 = arith.constant 0 : index
    %4 = vector.load %arg4[%c2, %c0_4, %c0_5] : memref<4x64x64xf32, #tpu.memory_space<vmem>>, vector<1x64x64xf32>
    %5 = vector.shape_cast %4 : vector<1x64x64xf32> to vector<64x64xf32>
    %c3 = arith.constant 3 : index
    %c0_6 = arith.constant 0 : index
    %c0_7 = arith.constant 0 : index
    %6 = vector.load %arg4[%c3, %c0_6, %c0_7] : memref<4x64x64xf32, #tpu.memory_space<vmem>>, vector<1x64x64xf32>
    %7 = vector.shape_cast %6 : vector<1x64x64xf32> to vector<64x64xf32>
    %c0_8 = arith.constant 0 : index
    %c0_9 = arith.constant 0 : index
    %c0_10 = arith.constant 0 : index
    %8 = vector.load %arg5[%c0_8, %c0_9, %c0_10] : memref<4x64x1xf32, #tpu.memory_space<vmem>>, vector<1x64x1xf32>
    %9 = vector.shape_cast %8 : vector<1x64x1xf32> to vector<64x1xf32>
    %c1_11 = arith.constant 1 : index
    %c0_12 = arith.constant 0 : index
    %c0_13 = arith.constant 0 : index
    %10 = vector.load %arg5[%c1_11, %c0_12, %c0_13] : memref<4x64x1xf32, #tpu.memory_space<vmem>>, vector<1x64x1xf32>
    %11 = vector.shape_cast %10 : vector<1x64x1xf32> to vector<64x1xf32>
    %c2_14 = arith.constant 2 : index
    %c0_15 = arith.constant 0 : index
    %c0_16 = arith.constant 0 : index
    %12 = vector.load %arg5[%c2_14, %c0_15, %c0_16] : memref<4x64x1xf32, #tpu.memory_space<vmem>>, vector<1x64x1xf32>
    %13 = vector.shape_cast %12 : vector<1x64x1xf32> to vector<64x1xf32>
    %c3_17 = arith.constant 3 : index
    %c0_18 = arith.constant 0 : index
    %c0_19 = arith.constant 0 : index
    %14 = vector.load %arg5[%c3_17, %c0_18, %c0_19] : memref<4x64x1xf32, #tpu.memory_space<vmem>>, vector<1x64x1xf32>
    %15 = vector.shape_cast %14 : vector<1x64x1xf32> to vector<64x1xf32>
    %c0_20 = arith.constant 0 : index
    %c0_21 = arith.constant 0 : index
    %c0_22 = arith.constant 0 : index
    %16 = vector.load %arg2[%c0_20, %c0_21, %c0_22] : memref<1x64x256xf32, #tpu.memory_space<vmem>>, vector<1x64x256xf32>
    %17 = vector.shape_cast %16 : vector<1x64x256xf32> to vector<64x256xf32>
    %cst = arith.constant dense<0.000000e+00> : vector<64x256xf32>
    %18 = tpu.matmul %1, %17, %cst {dimension_numbers = #tpu.dot_dimension_numbers<[1], [0], [0], [1], [0, 0, 1, 1], [], []>} : vector<64x64xf32>, vector<64x256xf32>, vector<64x256xf32> -> vector<64x256xf32>
    %19 = vector.broadcast %9 : vector<64x1xf32> to vector<64x256xf32>
    %20 = arith.addf %18, %19 : vector<64x256xf32>
    %cst_23 = arith.constant 0.000000e+00 : f32
    %21 = vector.broadcast %cst_23 : f32 to vector<64x256xf32>
    %22 = arith.maximumf %20, %21 : vector<64x256xf32>
    %c0_24 = arith.constant 0 : index
    %c0_25 = arith.constant 0 : index
    %c0_26 = arith.constant 0 : index
    %23 = vector.load %arg3[%c0_24, %c0_25, %c0_26] : memref<1x64x256xf32, #tpu.memory_space<vmem>>, vector<1x64x256xf32>
    %24 = vector.shape_cast %23 : vector<1x64x256xf32> to vector<64x256xf32>
    %cst_27 = arith.constant dense<0.000000e+00> : vector<64x256xf32>
    %25 = tpu.matmul %3, %24, %cst_27 {dimension_numbers = #tpu.dot_dimension_numbers<[1], [0], [0], [1], [0, 0, 1, 1], [], []>} : vector<64x64xf32>, vector<64x256xf32>, vector<64x256xf32> -> vector<64x256xf32>
    %26 = vector.broadcast %11 : vector<64x1xf32> to vector<64x256xf32>
    %27 = arith.addf %25, %26 : vector<64x256xf32>
    %cst_28 = arith.constant 0.000000e+00 : f32
    %28 = vector.broadcast %cst_28 : f32 to vector<64x256xf32>
    %29 = arith.maximumf %27, %28 : vector<64x256xf32>
    %cst_29 = arith.constant 5.000000e-01 : f32
    %30 = vector.broadcast %cst_29 : f32 to vector<64x256xf32>
    %31 = arith.mulf %30, %22 : vector<64x256xf32>
    %32 = math.tanh %31 : vector<64x256xf32>
    %cst_30 = arith.constant 1.000000e+00 : f32
    %33 = vector.broadcast %cst_30 : f32 to vector<64x256xf32>
    %34 = arith.addf %32, %33 : vector<64x256xf32>
    %cst_31 = arith.constant 5.000000e-01 : f32
    %35 = vector.broadcast %cst_31 : f32 to vector<64x256xf32>
    %36 = arith.mulf %35, %34 : vector<64x256xf32>
    %cst_32 = arith.constant 5.000000e-01 : f32
    %37 = vector.broadcast %cst_32 : f32 to vector<64x256xf32>
    %38 = arith.mulf %37, %29 : vector<64x256xf32>
    %39 = math.tanh %38 : vector<64x256xf32>
    %cst_33 = arith.constant 1.000000e+00 : f32
    %40 = vector.broadcast %cst_33 : f32 to vector<64x256xf32>
    %41 = arith.addf %39, %40 : vector<64x256xf32>
    %cst_34 = arith.constant 5.000000e-01 : f32
    %42 = vector.broadcast %cst_34 : f32 to vector<64x256xf32>
    %43 = arith.mulf %42, %41 : vector<64x256xf32>
    %44 = arith.mulf %36, %43 : vector<64x256xf32>
    %cst_35 = arith.constant 1.000000e+00 : f32
    %45 = vector.broadcast %cst_35 : f32 to vector<64x256xf32>
    %46 = arith.addf %45, %36 : vector<64x256xf32>
    %47 = arith.mulf %22, %46 : vector<64x256xf32>
    %48 = arith.mulf %44, %29 : vector<64x256xf32>
    %49 = arith.addf %47, %48 : vector<64x256xf32>
    %cst_36 = arith.constant 1.000000e+00 : f32
    %50 = vector.broadcast %cst_36 : f32 to vector<64x256xf32>
    %51 = arith.addf %50, %43 : vector<64x256xf32>
    %52 = arith.mulf %29, %51 : vector<64x256xf32>
    %53 = arith.mulf %44, %49 : vector<64x256xf32>
    %54 = arith.addf %52, %53 : vector<64x256xf32>
    %cst_37 = arith.constant dense<0.000000e+00> : vector<64x256xf32>
    %55 = tpu.matmul %5, %49, %cst_37 {dimension_numbers = #tpu.dot_dimension_numbers<[1], [0], [0], [1], [0, 0, 1, 1], [], []>} : vector<64x64xf32>, vector<64x256xf32>, vector<64x256xf32> -> vector<64x256xf32>
    %56 = vector.broadcast %13 : vector<64x1xf32> to vector<64x256xf32>
    %57 = arith.addf %55, %56 : vector<64x256xf32>
    %cst_38 = arith.constant 0.000000e+00 : f32
    %58 = vector.broadcast %cst_38 : f32 to vector<64x256xf32>
    %59 = arith.maximumf %57, %58 : vector<64x256xf32>
    %c0_39 = arith.constant 0 : index
    %c0_40 = arith.constant 0 : index
    %c0_41 = arith.constant 0 : index
    %60 = vector.load %arg6[%c0_39, %c0_40, %c0_41] : memref<1x64x256xf32, #tpu.memory_space<vmem>>, vector<1x64x256xf32>
    %61 = vector.shape_cast %60 : vector<1x64x256xf32> to vector<64x256xf32>
    %62 = vector.shape_cast %59 : vector<64x256xf32> to vector<1x64x256xf32>
    tpu.vector_store %arg6[%c0_39, %c0_40, %c0_41], %62 {strides = array<i32>} : memref<1x64x256xf32, #tpu.memory_space<vmem>>, vector<1x64x256xf32>,
    %cst_42 = arith.constant dense<0.000000e+00> : vector<64x256xf32>
    %63 = tpu.matmul %7, %54, %cst_42 {dimension_numbers = #tpu.dot_dimension_numbers<[1], [0], [0], [1], [0, 0, 1, 1], [], []>} : vector<64x64xf32>, vector<64x256xf32>, vector<64x256xf32> -> vector<64x256xf32>
    %64 = vector.broadcast %15 : vector<64x1xf32> to vector<64x256xf32>
    %65 = arith.addf %63, %64 : vector<64x256xf32>
    %cst_43 = arith.constant 0.000000e+00 : f32
    %66 = vector.broadcast %cst_43 : f32 to vector<64x256xf32>
    %67 = arith.maximumf %65, %66 : vector<64x256xf32>
    %c0_44 = arith.constant 0 : index
    %c0_45 = arith.constant 0 : index
    %c0_46 = arith.constant 0 : index
    %68 = vector.load %arg7[%c0_44, %c0_45, %c0_46] : memref<1x64x256xf32, #tpu.memory_space<vmem>>, vector<1x64x256xf32>
    %69 = vector.shape_cast %68 : vector<1x64x256xf32> to vector<64x256xf32>
    %70 = vector.shape_cast %67 : vector<64x256xf32> to vector<1x64x256xf32>
    tpu.vector_store %arg7[%c0_44, %c0_45, %c0_46], %70 {strides = array<i32>} : memref<1x64x256xf32, #tpu.memory_space<vmem>>, vector<1x64x256xf32>,
    return
  }
  func.func @transform_0(%arg0: i32, %arg1: i32) -> (i32, i32, i32) {
    %c0_i32 = arith.constant 0 : i32
    %c0_i32_0 = arith.constant 0 : i32
    return %arg0, %c0_i32, %arg1 : i32, i32, i32
  }
  func.func @transform_1(%arg0: i32, %arg1: i32) -> (i32, i32, i32) {
    %c0_i32 = arith.constant 0 : i32
    %c0_i32_0 = arith.constant 0 : i32
    return %arg0, %c0_i32, %arg1 : i32, i32, i32
  }
  func.func @transform_2(%arg0: i32, %arg1: i32) -> (i32, i32, i32) {
    %c0_i32 = arith.constant 0 : i32
    %c0_i32_0 = arith.constant 0 : i32
    %c0_i32_1 = arith.constant 0 : i32
    %c0_i32_2 = arith.constant 0 : i32
    return %c0_i32, %c0_i32_0, %c0_i32_1 : i32, i32, i32
  }
  func.func @transform_3(%arg0: i32, %arg1: i32) -> (i32, i32, i32) {
    %c0_i32 = arith.constant 0 : i32
    %c0_i32_0 = arith.constant 0 : i32
    %c0_i32_1 = arith.constant 0 : i32
    %c0_i32_2 = arith.constant 0 : i32
    return %c0_i32, %c0_i32_0, %c0_i32_1 : i32, i32, i32
  }
  func.func @transform_4(%arg0: i32, %arg1: i32) -> (i32, i32, i32) {
    %c0_i32 = arith.constant 0 : i32
    %c0_i32_0 = arith.constant 0 : i32
    return %arg0, %c0_i32, %arg1 : i32, i32, i32
  }
  func.func @transform_5(%arg0: i32, %arg1: i32) -> (i32, i32, i32) {
    %c0_i32 = arith.constant 0 : i32
    %c0_i32_0 = arith.constant 0 : i32
    return %arg0, %c0_i32, %arg1 : i32, i32, i32
  }
}

</mosaic_0001>

<llo_original>
// kernel: double_forward.1
$region0: #{double_forward.1}
  #allocation0 [shape = 'u32[]', space=smem, size = 0x4, offset = 0x4, fixed_abs, tag = 'smem constant byte address 0x4 - core index']
  #allocation1 [shape = 'u32[144,128]{1,0:T(1,128)}', space=vmem, size = 0x12000, scoped, tag = 'internal scratch']
  %s0 = inlined_call_operand.vmem [shape: f32[2,64,256], index: 0, kind: input, shape index: {}]
  %s1 = inlined_call_operand.vmem [shape: f32[2,64,256], index: 1, kind: input, shape index: {}]
  %s2 = inlined_call_operand.vmem [shape: f32[4,64,64], index: 2, kind: input, shape index: {}]
  %s3 = inlined_call_operand.vmem [shape: f32[4,64,1], index: 3, kind: input, shape index: {}]
  %s4 = inlined_call_operand.vmem [shape: f32[2,64,256], index: 4, kind: output, shape index: {0}]
  %s5 = inlined_call_operand.vmem [shape: f32[2,64,256], index: 5, kind: output, shape index: {1}]
  %6 = xla_tuple %s4, %s5
  %s7 = sld [smem:[#allocation0]]
  $region57: #{double_forward.1} parent=0
    _
  %s9 = ssub.s32 1, %s7
  %s10 = scalar_select 0, %s9, %s7
  loop: start=0, step=1, limit=4
  $region2: #{double_forward.1} parent=0 // loop_pre_header
    _
  $region3: #{double_forward.1} parent=0 // loop_header
    %s12 = sphi 0, %s16
    %p13 = scmp.ge.s32.totalorder %s12, 4
    %s19 = sphi 0, %s31
    %s20 = sphi 0, %s27
    %s21 = sphi 0, %s19
    %s22 = sphi 0, %s20
    %s23 = sphi 0, %s21
    %s24 = sphi 0, %s22
    %s36 = sphi 0, %s38
    %s39 = sphi 0, %s36
    %s40 = sphi 0, %s39
    %s56 = sphi 0, %s40
    %s64 = sphi 0, %s66
    %s67 = sphi 0, %s64
    %s68 = sphi 0, %s67
    %s84 = sphi 0, %s68
    %s88 = sphi 0, %s88
    %s90 = sphi 0, %s88
    %s91 = sphi 0, %s90
    %s105 = sphi 0, %s91
    %s109 = sphi 0, %s109
    %s111 = sphi 0, %s109
    %s112 = sphi 0, %s111
    %s126 = sphi 0, %s112
    %s134 = sphi 0, %s136
    %s137 = sphi 0, %s134
    %s138 = sphi 0, %s137
    %s154 = sphi 0, %s138
    %s162 = sphi 0, %s164
    %s165 = sphi 0, %s162
    %s166 = sphi 0, %s165
    %s182 = sphi 0, %s166
  $region4: #{double_forward.1} parent=0 // loop_header_branch
    %15 = sbr.rel (%p13) target = $region8
  $region5: #{double_forward.1} parent=0 // loop_body
    %s17 = ssub.s32 %s12, 1
    %s18 = ssub.s32 %s12, 2
    %s25 = sadd.s32 1, %s20
    %p26 = scmp.ge.s32.totalorder %s25, 1
    %s27 = scalar_select %p26, 0, %s25
    %s28 = sadd.s32 1, %s19
    %s29 = scalar_select %p26, %s28, %s19
    %p30 = scmp.ge.s32.totalorder %s29, 2
    %s31 = scalar_select %p30, 0, %s29
    %s32 = ssub.s32 %s19, %s31
    %s33 = ssub.s32 %s20, %s27
    %s34 = sor.u32 %s32, %s33
    %p35 = scmp.eq.s32.totalorder %s34, 0
    %s37 = sadd.s32 %s36, 1
    %s38 = scalar_select %p35, %s36, %s37
    %p41 = pneg %p35
    %p42 = scmp.eq.s32.totalorder %s12, 1
    %p43 = por %p41, %p42
    %p44 = scmp.ne.s32.totalorder %s36, %s39
    %p45 = scmp.eq.s32.totalorder %s12, 0
    %p46 = por %p44, %p45
    %p47 = scmp.ne.s32.totalorder %s36, %s39
    %p48 = scmp.eq.s32.totalorder %s17, 1
    %p49 = por %p47, %p48
    %p50 = scmp.ne.s32.totalorder %s39, %s40
    %p51 = scmp.eq.s32.totalorder %s17, 0
    %p52 = por %p50, %p51
    %p53 = scmp.ne.s32.totalorder %s39, %s40
    %p54 = scmp.eq.s32.totalorder %s18, 1
    %p55 = por %p53, %p54
    %p57 = scmp.ne.s32.totalorder %s40, %s56
    %p58 = scmp.eq.s32.totalorder %s18, 0
    %p59 = por %p57, %p58
    %s60 = ssub.s32 %s19, %s31
    %s61 = ssub.s32 %s20, %s27
    %s62 = sor.u32 %s60, %s61
    %p63 = scmp.eq.s32.totalorder %s62, 0
    %s65 = sadd.s32 %s64, 1
    %s66 = scalar_select %p63, %s64, %s65
    %p69 = pneg %p63
    %p70 = scmp.eq.s32.totalorder %s12, 1
    %p71 = por %p69, %p70
    %p72 = scmp.ne.s32.totalorder %s64, %s67
    %p73 = scmp.eq.s32.totalorder %s12, 0
    %p74 = por %p72, %p73
    %p75 = scmp.ne.s32.totalorder %s64, %s67
    %p76 = scmp.eq.s32.totalorder %s17, 1
    %p77 = por %p75, %p76
    %p78 = scmp.ne.s32.totalorder %s67, %s68
    %p79 = scmp.eq.s32.totalorder %s17, 0
    %p80 = por %p78, %p79
    %p81 = scmp.ne.s32.totalorder %s67, %s68
    %p82 = scmp.eq.s32.totalorder %s18, 1
    %p83 = por %p81, %p82
    %p85 = scmp.ne.s32.totalorder %s68, %s84
    %p86 = scmp.eq.s32.totalorder %s18, 0
    %p87 = por %p85, %p86
    %s89 = sadd.s32 %s88, 1
    %p92 = scmp.eq.s32.totalorder %s12, 1
    %p93 = scmp.ne.s32.totalorder %s88, %s90
    %p94 = scmp.eq.s32.totalorder %s12, 0
    %p95 = por %p93, %p94
    %p96 = scmp.ne.s32.totalorder %s88, %s90
    %p97 = scmp.eq.s32.totalorder %s17, 1
    %p98 = por %p96, %p97
    %p99 = scmp.ne.s32.totalorder %s90, %s91
    %p100 = scmp.eq.s32.totalorder %s17, 0
    %p101 = por %p99, %p100
    %p102 = scmp.ne.s32.totalorder %s90, %s91
    %p103 = scmp.eq.s32.totalorder %s18, 1
    %p104 = por %p102, %p103
    %p106 = scmp.ne.s32.totalorder %s91, %s105
    %p107 = scmp.eq.s32.totalorder %s18, 0
    %p108 = por %p106, %p107
    %s110 = sadd.s32 %s109, 1
    %p113 = scmp.eq.s32.totalorder %s12, 1
    %p114 = scmp.ne.s32.totalorder %s109, %s111
    %p115 = scmp.eq.s32.totalorder %s12, 0
    %p116 = por %p114, %p115
    %p117 = scmp.ne.s32.totalorder %s109, %s111
    %p118 = scmp.eq.s32.totalorder %s17, 1
    %p119 = por %p117, %p118
    %p120 = scmp.ne.s32.totalorder %s111, %s112
    %p121 = scmp.eq.s32.totalorder %s17, 0
    %p122 = por %p120, %p121
    %p123 = scmp.ne.s32.totalorder %s111, %s112
    %p124 = scmp.eq.s32.totalorder %s18, 1
    %p125 = por %p123, %p124
    %p127 = scmp.ne.s32.totalorder %s112, %s126
    %p128 = scmp.eq.s32.totalorder %s18, 0
    %p129 = por %p127, %p128
    %s130 = ssub.s32 %s19, %s31
    %s131 = ssub.s32 %s20, %s27
    %s132 = sor.u32 %s130, %s131
    %p133 = scmp.eq.s32.totalorder %s132, 0
    %s135 = sadd.s32 %s134, 1
    %s136 = scalar_select %p133, %s134, %s135
    %p139 = pneg %p133
    %p140 = scmp.eq.s32.totalorder %s12, 1
    %p141 = por %p139, %p140
    %p142 = scmp.ne.s32.totalorder %s134, %s137
    %p143 = scmp.eq.s32.totalorder %s12, 0
    %p144 = por %p142, %p143
    %p145 = scmp.ne.s32.totalorder %s134, %s137
    %p146 = scmp.eq.s32.totalorder %s17, 1
    %p147 = por %p145, %p146
    %p148 = scmp.ne.s32.totalorder %s137, %s138
    %p149 = scmp.eq.s32.totalorder %s17, 0
    %p150 = por %p148, %p149
    %p151 = scmp.ne.s32.totalorder %s137, %s138
    %p152 = scmp.eq.s32.totalorder %s18, 1
    %p153 = por %p151, %p152
    %p155 = scmp.ne.s32.totalorder %s138, %s154
    %p156 = scmp.eq.s32.totalorder %s18, 0
    %p157 = por %p155, %p156
    %s158 = ssub.s32 %s19, %s31
    %s159 = ssub.s32 %s20, %s27
    %s160 = sor.u32 %s158, %s159
    %p161 = scmp.eq.s32.totalorder %s160, 0
    %s163 = sadd.s32 %s162, 1
    %s164 = scalar_select %p161, %s162, %s163
    %p167 = pneg %p161
    %p168 = scmp.eq.s32.totalorder %s12, 1
    %p169 = por %p167, %p168
    %p170 = scmp.ne.s32.totalorder %s162, %s165
    %p171 = scmp.eq.s32.totalorder %s12, 0
    %p172 = por %p170, %p171
    %p173 = scmp.ne.s32.totalorder %s162, %s165
    %p174 = scmp.eq.s32.totalorder %s17, 1
    %p175 = por %p173, %p174
    %p176 = scmp.ne.s32.totalorder %s165, %s166
    %p177 = scmp.eq.s32.totalorder %s17, 0
    %p178 = por %p176, %p177
    %p179 = scmp.ne.s32.totalorder %s165, %s166
    %p180 = scmp.eq.s32.totalorder %s18, 1
    %p181 = por %p179, %p180
    %p183 = scmp.ne.s32.totalorder %s166, %s182
    %p184 = scmp.eq.s32.totalorder %s18, 0
    %p185 = por %p183, %p184
    %p186 = scmp.le.s32.totalorder 1, %s12
    %p187 = scmp.lt.s32.totalorder %s12, 3
    %p188 = pnand %p186, %p187
    %p189 = pneg %p188
    // Predicated region
    $region9: #{double_forward.1} parent=5 // pred_check
      _
    $region10: #{double_forward.1} parent=5 // pred_check_branch
      %191 = sbr.rel (%p188) target = $region12
    $region11: #{double_forward.1} parent=5 // pred_region
      %s192 = ssub.s32 %s12, 1
      // Predicated region
      $region13: #{double_forward.1} parent=11 // pred_check
        %p193 = pneg %p101
      $region14: #{double_forward.1} parent=11 // pred_check_branch
        %195 = sbr.rel (%p193) target = $region16
      $region15: #{double_forward.1} parent=11 // pred_region
        _
      $region16: #{double_forward.1} parent=11 // pred_fallthru
        _
      // Predicated region
      $region17: #{double_forward.1} parent=11 // pred_check
        %p196 = pneg %p122
      $region18: #{double_forward.1} parent=11 // pred_check_branch
        %198 = sbr.rel (%p196) target = $region20
      $region19: #{double_forward.1} parent=11 // pred_region
        _
      $region20: #{double_forward.1} parent=11 // pred_fallthru
        _
    $region12: #{double_forward.1} parent=5 // pred_fallthru
      _
    %p199 = scmp.lt.s32.totalorder %s12, 2
    // Predicated region
    $region21: #{double_forward.1} parent=5 // pred_check
      %p200 = pneg %p199
    $region22: #{double_forward.1} parent=5 // pred_check_branch
      %202 = sbr.rel (%p200) target = $region24
    $region23: #{double_forward.1} parent=5 // pred_region
      // Predicated region
      $region25: #{double_forward.1} parent=23 // pred_check
        %p203 = pneg %p46
      $region26: #{double_forward.1} parent=23 // pred_check_branch
        %205 = sbr.rel (%p203) target = $region28
      $region27: #{double_forward.1} parent=23 // pred_region
        %s206 = smul.u32 2, %s20
        %p207 = scmp.lt.s32.totalorder %s19, 1
        %s208 = scalar_select %p207, %s19, 1
        %p209 = scmp.lt.s32.totalorder %s206, 1
        %s210 = scalar_select %p209, %s206, 1
        %s211 = smul.addr %s208, 16
        %s212 = sadd.s32 %s210, %s211
        %s213 = smul.addr %s212, 8
        %s214 = scalar_lea.vmem %s0, %s213
        %s215 = smul.u32 2, %s20
      $region28: #{double_forward.1} parent=23 // pred_fallthru
        _
      // Predicated region
      $region29: #{double_forward.1} parent=23 // pred_check
        %p216 = pneg %p74
      $region30: #{double_forward.1} parent=23 // pred_check_branch
        %218 = sbr.rel (%p216) target = $region32
      $region31: #{double_forward.1} parent=23 // pred_region
        %s219 = smul.u32 2, %s20
        %p220 = scmp.lt.s32.totalorder %s19, 1
        %s221 = scalar_select %p220, %s19, 1
        %p222 = scmp.lt.s32.totalorder %s219, 1
        %s223 = scalar_select %p222, %s219, 1
        %s224 = smul.addr %s221, 16
        %s225 = sadd.s32 %s223, %s224
        %s226 = smul.addr %s225, 8
        %s227 = scalar_lea.vmem %s1, %s226
        %s228 = smul.u32 2, %s20
      $region32: #{double_forward.1} parent=23 // pred_fallthru
        _
    $region24: #{double_forward.1} parent=5 // pred_fallthru
      _
    %p229 = scmp.le.s32.totalorder 1, %s12
    %p230 = scmp.lt.s32.totalorder %s12, 3
    %p231 = pnand %p229, %p230
    %p232 = pneg %p231
    // Predicated region
    $region33: #{double_forward.1} parent=5 // pred_check
      _
    $region34: #{double_forward.1} parent=5 // pred_check_branch
      %234 = sbr.rel (%p231) target = $region36
    $region35: #{double_forward.1} parent=5 // pred_region
      %s235 = ssub.s32 %s12, 1
      %s236 = smul.u32 2, %s22
      %p237 = scmp.lt.s32.totalorder %s21, 1
      %s238 = scalar_select %p237, %s21, 1
      %p239 = scmp.lt.s32.totalorder %s236, 1
      %s240 = scalar_select %p239, %s236, 1
      %s241 = smul.addr %s238, 16
      %s242 = sadd.s32 %s240, %s241
      %s243 = smul.addr %s242, 8
      %s244 = scalar_lea.vmem %s0, %s243
      %p245 = pneg %p52
      %p246 = pneg %p49
      %s247 = smul.u32 2, %s22
      %p248 = scmp.lt.s32.totalorder %s21, 1
      %s249 = scalar_select %p248, %s21, 1
      %p250 = scmp.lt.s32.totalorder %s247, 1
      %s251 = scalar_select %p250, %s247, 1
      %s252 = smul.addr %s249, 16
      %s253 = sadd.s32 %s251, %s252
      %s254 = smul.addr %s253, 8
      %s255 = scalar_lea.vmem %s1, %s254
      %p256 = pneg %p80
      %p257 = pneg %p77
      %p258 = pneg %p101
      %p259 = pneg %p98
      %p260 = pneg %p122
      %p261 = pneg %p119
      %p262 = pneg %p150
      %p263 = pneg %p147
      %s264 = smul.u32 2, %s22
      %p265 = scmp.lt.s32.totalorder %s21, 1
      %s266 = scalar_select %p265, %s21, 1
      %p267 = scmp.lt.s32.totalorder %s264, 1
      %s268 = scalar_select %p267, %s264, 1
      %s269 = smul.addr %s266, 16
      %s270 = sadd.s32 %s268, %s269
      %s271 = smul.addr %s270, 8
      %s272 = scalar_lea.vmem %s4, %s271
      %p273 = pneg %p178
      %p274 = pneg %p175
      %s275 = smul.u32 2, %s22
      %p276 = scmp.lt.s32.totalorder %s21, 1
      %s277 = scalar_select %p276, %s21, 1
      %p278 = scmp.lt.s32.totalorder %s275, 1
      %s279 = scalar_select %p278, %s275, 1
      %s280 = smul.addr %s277, 16
      %s281 = sadd.s32 %s279, %s280
      %s282 = smul.addr %s281, 8
      %s283 = scalar_lea.vmem %s5, %s282
      %s284 = smul.u32 2, %s22
      %p285 = scmp.lt.s32.totalorder %s21, 1
      %s286 = scalar_select %p285, %s21, 1
      %p287 = scmp.lt.s32.totalorder %s284, 1
      %s288 = scalar_select %p287, %s284, 1
      %s289 = smul.addr %s286, 16
      %s290 = sadd.s32 %s288, %s289
      %s291 = smul.addr %s290, 8
      %s292 = scalar_lea.vmem %s0, %s291
      %s293 = smul.u32 2, %s22
      %s294 = smul.u32 2, %s22
      %p295 = scmp.lt.s32.totalorder %s21, 1
      %s296 = scalar_select %p295, %s21, 1
      %p297 = scmp.lt.s32.totalorder %s294, 1
      %s298 = scalar_select %p297, %s294, 1
      %s299 = smul.addr %s296, 16
      %s300 = sadd.s32 %s298, %s299
      %s301 = smul.addr %s300, 8
      %s302 = scalar_lea.vmem %s1, %s301
      %s303 = smul.u32 2, %s22
      %s304 = smul.u32 2, %s22
      %p305 = scmp.lt.s32.totalorder %s21, 1
      %s306 = scalar_select %p305, %s21, 1
      %p307 = scmp.lt.s32.totalorder %s304, 1
      %s308 = scalar_select %p307, %s304, 1
      %s309 = smul.addr %s306, 16
      %s310 = sadd.s32 %s308, %s309
      %s311 = smul.addr %s310, 8
      %s312 = scalar_lea.vmem %s4, %s311
      %s313 = smul.u32 2, %s22
      %s314 = smul.u32 2, %s22
      %p315 = scmp.lt.s32.totalorder %s21, 1
      %s316 = scalar_select %p315, %s21, 1
      %p317 = scmp.lt.s32.totalorder %s314, 1
      %s318 = scalar_select %p317, %s314, 1
      %s319 = smul.addr %s316, 16
      %s320 = sadd.s32 %s318, %s319
      %s321 = smul.addr %s320, 8
      %s322 = scalar_lea.vmem %s5, %s321
      %s323 = smul.u32 2, %s22
      %v324 = vld [vmem:[%s2] sm:$0xff]
      %v325 = vld [vmem:[%s2 + $0x8] sm:$0xff]
      %v326 = vld [vmem:[%s2 + $0x10] sm:$0xff]
      %v327 = vld [vmem:[%s2 + $0x18] sm:$0xff]
      %v328 = vld [vmem:[%s2 + $0x20] sm:$0xff]
      %v329 = vld [vmem:[%s2 + $0x28] sm:$0xff]
      %v330 = vld [vmem:[%s2 + $0x30] sm:$0xff]
      %v331 = vld [vmem:[%s2 + $0x38] sm:$0xff]
      %s332 = scalar_lea.vmem %s2, 64
      %v333 = vld [vmem:[%s332] sm:$0xff]
      %v334 = vld [vmem:[%s332 + $0x8] sm:$0xff]
      %v335 = vld [vmem:[%s332 + $0x10] sm:$0xff]
      %v336 = vld [vmem:[%s332 + $0x18] sm:$0xff]
      %v337 = vld [vmem:[%s332 + $0x20] sm:$0xff]
      %v338 = vld [vmem:[%s332 + $0x28] sm:$0xff]
      %v339 = vld [vmem:[%s332 + $0x30] sm:$0xff]
      %v340 = vld [vmem:[%s332 + $0x38] sm:$0xff]
      %s341 = scalar_lea.vmem %s2, 128
      %v342 = vld [vmem:[%s341] sm:$0xff]
      %v343 = vld [vmem:[%s341 + $0x8] sm:$0xff]
      %v344 = vld [vmem:[%s341 + $0x10] sm:$0xff]
      %v345 = vld [vmem:[%s341 + $0x18] sm:$0xff]
      %v346 = vld [vmem:[%s341 + $0x20] sm:$0xff]
      %v347 = vld [vmem:[%s341 + $0x28] sm:$0xff]
      %v348 = vld [vmem:[%s341 + $0x30] sm:$0xff]
      %v349 = vld [vmem:[%s341 + $0x38] sm:$0xff]
      %s350 = scalar_lea.vmem %s2, 192
      %v351 = vld [vmem:[%s350] sm:$0xff]
      %v352 = vld [vmem:[%s350 + $0x8] sm:$0xff]
      %v353 = vld [vmem:[%s350 + $0x10] sm:$0xff]
      %v354 = vld [vmem:[%s350 + $0x18] sm:$0xff]
      %v355 = vld [vmem:[%s350 + $0x20] sm:$0xff]
      %v356 = vld [vmem:[%s350 + $0x28] sm:$0xff]
      %v357 = vld [vmem:[%s350 + $0x30] sm:$0xff]
      %v358 = vld [vmem:[%s350 + $0x38] sm:$0xff]
      %v359 = vld [vmem:[%s3] sm:$0xff]
      %v360 = vld [vmem:[%s3 + $0x8] sm:$0xff]
      %v361 = vld [vmem:[%s3 + $0x10] sm:$0xff]
      %v362 = vld [vmem:[%s3 + $0x18] sm:$0xff]
      %v363 = vld [vmem:[%s3 + $0x20] sm:$0xff]
      %v364 = vld [vmem:[%s3 + $0x28] sm:$0xff]
      %v365 = vld [vmem:[%s3 + $0x30] sm:$0xff]
      %v366 = vld [vmem:[%s3 + $0x38] sm:$0xff]
      %s367 = scalar_lea.vmem %s3, 64
      %v368 = vld [vmem:[%s367] sm:$0xff]
      %v369 = vld [vmem:[%s367 + $0x8] sm:$0xff]
      %v370 = vld [vmem:[%s367 + $0x10] sm:$0xff]
      %v371 = vld [vmem:[%s367 + $0x18] sm:$0xff]
      %v372 = vld [vmem:[%s367 + $0x20] sm:$0xff]
      %v373 = vld [vmem:[%s367 + $0x28] sm:$0xff]
      %v374 = vld [vmem:[%s367 + $0x30] sm:$0xff]
      %v375 = vld [vmem:[%s367 + $0x38] sm:$0xff]
      %s376 = scalar_lea.vmem %s3, 128
      %v377 = vld [vmem:[%s376] sm:$0xff]
      %v378 = vld [vmem:[%s376 + $0x8] sm:$0xff]
      %v379 = vld [vmem:[%s376 + $0x10] sm:$0xff]
      %v380 = vld [vmem:[%s376 + $0x18] sm:$0xff]
      %v381 = vld [vmem:[%s376 + $0x20] sm:$0xff]
      %v382 = vld [vmem:[%s376 + $0x28] sm:$0xff]
      %v383 = vld [vmem:[%s376 + $0x30] sm:$0xff]
      %v384 = vld [vmem:[%s376 + $0x38] sm:$0xff]
      %s385 = scalar_lea.vmem %s3, 192
      %v386 = vld [vmem:[%s385] sm:$0xff]
      %v387 = vld [vmem:[%s385 + $0x8] sm:$0xff]
      %v388 = vld [vmem:[%s385 + $0x10] sm:$0xff]
      %v389 = vld [vmem:[%s385 + $0x18] sm:$0xff]
      %v390 = vld [vmem:[%s385 + $0x20] sm:$0xff]
      %v391 = vld [vmem:[%s385 + $0x28] sm:$0xff]
      %v392 = vld [vmem:[%s385 + $0x30] sm:$0xff]
      %v393 = vld [vmem:[%s385 + $0x38] sm:$0xff]
      %v394 = vld [vmem:[%s292] sm:$0xff]
      %v395 = vld [vmem:[%s292 + $0x8] sm:$0xff]
      %v396 = vld [vmem:[%s292 + $0x10] sm:$0xff]
      %v397 = vld [vmem:[%s292 + $0x18] sm:$0xff]
      %v398 = vld [vmem:[%s292 + $0x20] sm:$0xff]
      %v399 = vld [vmem:[%s292 + $0x28] sm:$0xff]
      %v400 = vld [vmem:[%s292 + $0x30] sm:$0xff]
      %v401 = vld [vmem:[%s292 + $0x38] sm:$0xff]
      %v402 = vld [vmem:[%s292 + $0x40] sm:$0xff]
      %v403 = vld [vmem:[%s292 + $0x48] sm:$0xff]
      %v404 = vld [vmem:[%s292 + $0x50] sm:$0xff]
      %v405 = vld [vmem:[%s292 + $0x58] sm:$0xff]
      %v406 = vld [vmem:[%s292 + $0x60] sm:$0xff]
      %v407 = vld [vmem:[%s292 + $0x68] sm:$0xff]
      %v408 = vld [vmem:[%s292 + $0x70] sm:$0xff]
      %v409 = vld [vmem:[%s292 + $0x78] sm:$0xff]
      %411 = vset.pattern.permute.xlu0 0
      %412 = vperm.xlu0 %411, %v359
      %v413 = vpop.permute.xlu0 %412
      %416 = vset.pattern.permute.xlu0 0
      %417 = vperm.xlu0 %416, %v360
      %v418 = vpop.permute.xlu0 %417
      %421 = vset.pattern.permute.xlu0 0
      %422 = vperm.xlu0 %421, %v361
      %v423 = vpop.permute.xlu0 %422
      %426 = vset.pattern.permute.xlu0 0
      %427 = vperm.xlu0 %426, %v362
      %v428 = vpop.permute.xlu0 %427
      %431 = vset.pattern.permute.xlu0 0
      %432 = vperm.xlu0 %431, %v363
      %v433 = vpop.permute.xlu0 %432
      %436 = vset.pattern.permute.xlu0 0
      %437 = vperm.xlu0 %436, %v364
      %v438 = vpop.permute.xlu0 %437
      %441 = vset.pattern.permute.xlu0 0
      %442 = vperm.xlu0 %441, %v365
      %v443 = vpop.permute.xlu0 %442
      %446 = vset.pattern.permute.xlu0 0
      %447 = vperm.xlu0 %446, %v366
      %v448 = vpop.permute.xlu0 %447
      %vm450 = vcmask 523264
      %v452 = vsel %vm450, %v324, 0
      %v455 = vsel %vm450, %v325, 0
      %v458 = vsel %vm450, %v326, 0
      %v461 = vsel %vm450, %v327, 0
      %v464 = vsel %vm450, %v328, 0
      %v467 = vsel %vm450, %v329, 0
      %v470 = vsel %vm450, %v330, 0
      %v473 = vsel %vm450, %v331, 0
      %475 = vmatprep.subr.mxu0 0.0
      %476 = vmatpush1.msra.mxu0 0.0
      %477 = vmatprep.subr.mxu0 0.0
      %478 = vmatpush1.msra.mxu0 0.0
      %479 = vmatprep.subr.mxu0 0.0
      %480 = vmatpush1.msra.mxu0 0.0
      %481 = vmatprep.subr.mxu0 0.0
      %482 = vmatpush1.msra.mxu0 0.0
      %483 = vmatprep.subr.mxu0 0.0
      %484 = vmatpush1.msra.mxu0 0.0
      %485 = vmatprep.subr.mxu0 0.0
      %486 = vmatpush1.msra.mxu0 0.0
      %487 = vmatprep.subr.mxu0 0.0
      %488 = vmatpush1.msra.mxu0 0.0
      %489 = vmatprep.subr.mxu0 0.0
      %490 = vmatpush1.msra.mxu0 0.0
      %491 = vmatprep.subr.mxu0 %v409
      %492 = vmatpush1.msra.mxu0 %v408
      %493 = vmatprep.subr.mxu0 %v407
      %494 = vmatpush1.msra.mxu0 %v406
      %495 = vmatprep.subr.mxu0 %v405
      %496 = vmatpush1.msra.mxu0 %v404
      %497 = vmatprep.subr.mxu0 %v403
      %498 = vmatpush1.msra.mxu0 %v402
      %499 = vmatprep.subr.mxu0 %v401
      %500 = vmatpush1.msra.mxu0 %v400
      %501 = vmatprep.subr.mxu0 %v399
      %502 = vmatpush1.msra.mxu0 %v398
      %503 = vmatprep.subr.mxu0 %v397
      %504 = vmatpush1.msra.mxu0 %v396
      %505 = vmatprep.subr.mxu0 %v395
      %506 = vmatpush1.msra.mxu0 %v394
      %507 = vmatprep.subr.mxu0 0.0
      %508 = vmatpush2.msra.mxu0 0.0
      %509 = vmatprep.subr.mxu0 0.0
      %510 = vmatpush2.msra.mxu0 0.0
      %511 = vmatprep.subr.mxu0 0.0
      %512 = vmatpush2.msra.mxu0 0.0
      %513 = vmatprep.subr.mxu0 0.0
      %514 = vmatpush2.msra.mxu0 0.0
      %515 = vmatprep.subr.mxu0 0.0
      %516 = vmatpush2.msra.mxu0 0.0
      %517 = vmatprep.subr.mxu0 0.0
      %518 = vmatpush2.msra.mxu0 0.0
      %519 = vmatprep.subr.mxu0 0.0
      %520 = vmatpush2.msra.mxu0 0.0
      %521 = vmatprep.subr.mxu0 0.0
      %522 = vmatpush2.msra.mxu0 0.0
      %523 = vmatprep.subr.mxu0 0.0
      %524 = vmatpush2.msra.mxu0 0.0
      %525 = vmatprep.subr.mxu0 0.0
      %526 = vmatpush2.msra.mxu0 0.0
      %527 = vmatprep.subr.mxu0 0.0
      %528 = vmatpush2.msra.mxu0 0.0
      %529 = vmatprep.subr.mxu0 0.0
      %530 = vmatpush2.msra.mxu0 0.0
      %531 = vmatprep.subr.mxu0 0.0
      %532 = vmatpush2.msra.mxu0 0.0
      %533 = vmatprep.subr.mxu0 0.0
      %534 = vmatpush2.msra.mxu0 0.0
      %535 = vmatprep.subr.mxu0 0.0
      %536 = vmatpush2.msra.mxu0 0.0
      %537 = vmatprep.subr.mxu0 0.0
      %538 = vmatpush2.msra.mxu0 0.0
      %539 = vmatprep.mubr.f32.mxu0 0.0
      %540 = vmatmul.mubr.f32.gmra.mxu0 %v452
      %v541 = vpop.f32.mrf.mxu0
      %v542 = vadd.f32 %v413, %v541
      %v543 = vpop.f32.mrf.mxu0
      %v544 = vadd.f32 %v413, %v543
      %545 = vmatprep.mubr.f32.mxu0 0.0
      %546 = vmatmul.mubr.f32.gmra.mxu0 %v455
      %v547 = vpop.f32.mrf.mxu0
      %v548 = vadd.f32 %v418, %v547
      %v549 = vpop.f32.mrf.mxu0
      %v550 = vadd.f32 %v418, %v549
      %551 = vmatprep.mubr.f32.mxu0 0.0
      %552 = vmatmul.mubr.f32.gmra.mxu0 %v458
      %v553 = vpop.f32.mrf.mxu0
      %v554 = vadd.f32 %v423, %v553
      %v555 = vpop.f32.mrf.mxu0
      %v556 = vadd.f32 %v423, %v555
      %557 = vmatprep.mubr.f32.mxu0 0.0
      %558 = vmatmul.mubr.f32.gmra.mxu0 %v461
      %v559 = vpop.f32.mrf.mxu0
      %v560 = vadd.f32 %v428, %v559
      %v561 = vpop.f32.mrf.mxu0
      %v562 = vadd.f32 %v428, %v561
      %563 = vmatprep.mubr.f32.mxu0 0.0
      %564 = vmatmul.mubr.f32.gmra.mxu0 %v464
      %v565 = vpop.f32.mrf.mxu0
      %v566 = vadd.f32 %v433, %v565
      %v567 = vpop.f32.mrf.mxu0
      %v568 = vadd.f32 %v433, %v567
      %569 = vmatprep.mubr.f32.mxu0 0.0
      %570 = vmatmul.mubr.f32.gmra.mxu0 %v467
      %v571 = vpop.f32.mrf.mxu0
      %v572 = vadd.f32 %v438, %v571
      %v573 = vpop.f32.mrf.mxu0
      %v574 = vadd.f32 %v438, %v573
      %575 = vmatprep.mubr.f32.mxu0 0.0
      %576 = vmatmul.mubr.f32.gmra.mxu0 %v470
      %v577 = vpop.f32.mrf.mxu0
      %v578 = vadd.f32 %v443, %v577
      %v579 = vpop.f32.mrf.mxu0
      %v580 = vadd.f32 %v443, %v579
      %581 = vmatprep.mubr.f32.mxu0 0.0
      %582 = vmatmul.mubr.f32.gmra.mxu0 %v473
      %v583 = vpop.f32.mrf.mxu0
      %v584 = vadd.f32 %v448, %v583
      %v585 = vpop.f32.mrf.mxu0
      %v586 = vadd.f32 %v448, %v585
      %587 = vdwg.mxu0
      %v588 = vmax.f32 %v542, 0.0
      %v589 = vmax.f32 %v544, 0.0
      %v590 = vmax.f32 %v548, 0.0
      %v591 = vmax.f32 %v550, 0.0
      %v592 = vmax.f32 %v554, 0.0
      %v593 = vmax.f32 %v556, 0.0
      %v594 = vmax.f32 %v560, 0.0
      %v595 = vmax.f32 %v562, 0.0
      %v596 = vmax.f32 %v566, 0.0
      %v597 = vmax.f32 %v568, 0.0
      %v598 = vmax.f32 %v572, 0.0
      %v599 = vmax.f32 %v574, 0.0
      %v600 = vmax.f32 %v578, 0.0
      %v601 = vmax.f32 %v580, 0.0
      %v602 = vmax.f32 %v584, 0.0
      %v603 = vmax.f32 %v586, 0.0
      %v604 = vld [vmem:[%s302] sm:$0xff]
      %v605 = vld [vmem:[%s302 + $0x8] sm:$0xff]
      %v606 = vld [vmem:[%s302 + $0x10] sm:$0xff]
      %v607 = vld [vmem:[%s302 + $0x18] sm:$0xff]
      %v608 = vld [vmem:[%s302 + $0x20] sm:$0xff]
      %v609 = vld [vmem:[%s302 + $0x28] sm:$0xff]
      %v610 = vld [vmem:[%s302 + $0x30] sm:$0xff]
      %v611 = vld [vmem:[%s302 + $0x38] sm:$0xff]
      %v612 = vld [vmem:[%s302 + $0x40] sm:$0xff]
      %v613 = vld [vmem:[%s302 + $0x48] sm:$0xff]
      %v614 = vld [vmem:[%s302 + $0x50] sm:$0xff]
      %v615 = vld [vmem:[%s302 + $0x58] sm:$0xff]
      %v616 = vld [vmem:[%s302 + $0x60] sm:$0xff]
      %v617 = vld [vmem:[%s302 + $0x68] sm:$0xff]
      %v618 = vld [vmem:[%s302 + $0x70] sm:$0xff]
      %v619 = vld [vmem:[%s302 + $0x78] sm:$0xff]
      %621 = vset.pattern.permute.xlu0 0
      %622 = vperm.xlu0 %621, %v368
      %v623 = vpop.permute.xlu0 %622
      %626 = vset.pattern.permute.xlu0 0
      %627 = vperm.xlu0 %626, %v369
      %v628 = vpop.permute.xlu0 %627
      %631 = vset.pattern.permute.xlu0 0
      %632 = vperm.xlu0 %631, %v370
      %v633 = vpop.permute.xlu0 %632
      %636 = vset.pattern.permute.xlu0 0
      %637 = vperm.xlu0 %636, %v371
      %v638 = vpop.permute.xlu0 %637
      %641 = vset.pattern.permute.xlu0 0
      %642 = vperm.xlu0 %641, %v372
      %v643 = vpop.permute.xlu0 %642
      %646 = vset.pattern.permute.xlu0 0
      %647 = vperm.xlu0 %646, %v373
      %v648 = vpop.permute.xlu0 %647
      %651 = vset.pattern.permute.xlu0 0
      %652 = vperm.xlu0 %651, %v374
      %v653 = vpop.permute.xlu0 %652
      %656 = vset.pattern.permute.xlu0 0
      %657 = vperm.xlu0 %656, %v375
      %v658 = vpop.permute.xlu0 %657
      %v661 = vsel %vm450, %v333, 0
      %v664 = vsel %vm450, %v334, 0
      %v667 = vsel %vm450, %v335, 0
      %v670 = vsel %vm450, %v336, 0
      %v673 = vsel %vm450, %v337, 0
      %v676 = vsel %vm450, %v338, 0
      %v679 = vsel %vm450, %v339, 0
      %v682 = vsel %vm450, %v340, 0
      %684 = vmatprep.subr.mxu0 0.0
      %685 = vmatpush1.msra.mxu0 0.0
      %686 = vmatprep.subr.mxu0 0.0
      %687 = vmatpush1.msra.mxu0 0.0
      %688 = vmatprep.subr.mxu0 0.0
      %689 = vmatpush1.msra.mxu0 0.0
      %690 = vmatprep.subr.mxu0 0.0
      %691 = vmatpush1.msra.mxu0 0.0
      %692 = vmatprep.subr.mxu0 0.0
      %693 = vmatpush1.msra.mxu0 0.0
      %694 = vmatprep.subr.mxu0 0.0
      %695 = vmatpush1.msra.mxu0 0.0
      %696 = vmatprep.subr.mxu0 0.0
      %697 = vmatpush1.msra.mxu0 0.0
      %698 = vmatprep.subr.mxu0 0.0
      %699 = vmatpush1.msra.mxu0 0.0
      %700 = vmatprep.subr.mxu0 %v619
      %701 = vmatpush1.msra.mxu0 %v618
      %702 = vmatprep.subr.mxu0 %v617
      %703 = vmatpush1.msra.mxu0 %v616
      %704 = vmatprep.subr.mxu0 %v615
      %705 = vmatpush1.msra.mxu0 %v614
      %706 = vmatprep.subr.mxu0 %v613
      %707 = vmatpush1.msra.mxu0 %v612
      %708 = vmatprep.subr.mxu0 %v611
      %709 = vmatpush1.msra.mxu0 %v610
      %710 = vmatprep.subr.mxu0 %v609
      %711 = vmatpush1.msra.mxu0 %v608
      %712 = vmatprep.subr.mxu0 %v607
      %713 = vmatpush1.msra.mxu0 %v606
      %714 = vmatprep.subr.mxu0 %v605
      %715 = vmatpush1.msra.mxu0 %v604
      %716 = vmatprep.subr.mxu0 0.0
      %717 = vmatpush2.msra.mxu0 0.0
      %718 = vmatprep.subr.mxu0 0.0
      %719 = vmatpush2.msra.mxu0 0.0
      %720 = vmatprep.subr.mxu0 0.0
      %721 = vmatpush2.msra.mxu0 0.0
      %722 = vmatprep.subr.mxu0 0.0
      %723 = vmatpush2.msra.mxu0 0.0
      %724 = vmatprep.subr.mxu0 0.0
      %725 = vmatpush2.msra.mxu0 0.0
      %726 = vmatprep.subr.mxu0 0.0
      %727 = vmatpush2.msra.mxu0 0.0
      %728 = vmatprep.subr.mxu0 0.0
      %729 = vmatpush2.msra.mxu0 0.0
      %730 = vmatprep.subr.mxu0 0.0
      %731 = vmatpush2.msra.mxu0 0.0
      %732 = vmatprep.subr.mxu0 0.0
      %733 = vmatpush2.msra.mxu0 0.0
      %734 = vmatprep.subr.mxu0 0.0
      %735 = vmatpush2.msra.mxu0 0.0
      %736 = vmatprep.subr.mxu0 0.0
      %737 = vmatpush2.msra.mxu0 0.0
      %738 = vmatprep.subr.mxu0 0.0
      %739 = vmatpush2.msra.mxu0 0.0
      %740 = vmatprep.subr.mxu0 0.0
      %741 = vmatpush2.msra.mxu0 0.0
      %742 = vmatprep.subr.mxu0 0.0
      %743 = vmatpush2.msra.mxu0 0.0
      %744 = vmatprep.subr.mxu0 0.0
      %745 = vmatpush2.msra.mxu0 0.0
      %746 = vmatprep.subr.mxu0 0.0
      %747 = vmatpush2.msra.mxu0 0.0
      %748 = vmatprep.mubr.f32.mxu0 0.0
      %749 = vmatmul.mubr.f32.gmra.mxu0 %v661
      %v750 = vpop.f32.mrf.mxu0
      %v751 = vadd.f32 %v623, %v750
      %v752 = vpop.f32.mrf.mxu0
      %v753 = vadd.f32 %v623, %v752
      %754 = vmatprep.mubr.f32.mxu0 0.0
      %755 = vmatmul.mubr.f32.gmra.mxu0 %v664
      %v756 = vpop.f32.mrf.mxu0
      %v757 = vadd.f32 %v628, %v756
      %v758 = vpop.f32.mrf.mxu0
      %v759 = vadd.f32 %v628, %v758
      %760 = vmatprep.mubr.f32.mxu0 0.0
      %761 = vmatmul.mubr.f32.gmra.mxu0 %v667
      %v762 = vpop.f32.mrf.mxu0
      %v763 = vadd.f32 %v633, %v762
      %v764 = vpop.f32.mrf.mxu0
      %v765 = vadd.f32 %v633, %v764
      %766 = vmatprep.mubr.f32.mxu0 0.0
      %767 = vmatmul.mubr.f32.gmra.mxu0 %v670
      %v768 = vpop.f32.mrf.mxu0
      %v769 = vadd.f32 %v638, %v768
      %v770 = vpop.f32.mrf.mxu0
      %v771 = vadd.f32 %v638, %v770
      %772 = vmatprep.mubr.f32.mxu0 0.0
      %773 = vmatmul.mubr.f32.gmra.mxu0 %v673
      %v774 = vpop.f32.mrf.mxu0
      %v775 = vadd.f32 %v643, %v774
      %v776 = vpop.f32.mrf.mxu0
      %v777 = vadd.f32 %v643, %v776
      %778 = vmatprep.mubr.f32.mxu0 0.0
      %779 = vmatmul.mubr.f32.gmra.mxu0 %v676
      %v780 = vpop.f32.mrf.mxu0
      %v781 = vadd.f32 %v648, %v780
      %v782 = vpop.f32.mrf.mxu0
      %v783 = vadd.f32 %v648, %v782
      %784 = vmatprep.mubr.f32.mxu0 0.0
      %785 = vmatmul.mubr.f32.gmra.mxu0 %v679
      %v786 = vpop.f32.mrf.mxu0
      %v787 = vadd.f32 %v653, %v786
      %v788 = vpop.f32.mrf.mxu0
      %v789 = vadd.f32 %v653, %v788
      %790 = vmatprep.mubr.f32.mxu0 0.0
      %791 = vmatmul.mubr.f32.gmra.mxu0 %v682
      %v792 = vpop.f32.mrf.mxu0
      %v793 = vadd.f32 %v658, %v792
      %v794 = vpop.f32.mrf.mxu0
      %v795 = vadd.f32 %v658, %v794
      %796 = vdwg.mxu0
      %v797 = vmax.f32 %v751, 0.0
      %v798 = vmax.f32 %v753, 0.0
      %v799 = vmax.f32 %v757, 0.0
      %v800 = vmax.f32 %v759, 0.0
      %v801 = vmax.f32 %v763, 0.0
      %v802 = vmax.f32 %v765, 0.0
      %v803 = vmax.f32 %v769, 0.0
      %v804 = vmax.f32 %v771, 0.0
      %v805 = vmax.f32 %v775, 0.0
      %v806 = vmax.f32 %v777, 0.0
      %v807 = vmax.f32 %v781, 0.0
      %v808 = vmax.f32 %v783, 0.0
      %v809 = vmax.f32 %v787, 0.0
      %v810 = vmax.f32 %v789, 0.0
      %v811 = vmax.f32 %v793, 0.0
      %v812 = vmax.f32 %v795, 0.0
      %v813 = vmul.f32 %v588, 0.5
      %v814 = vmul.f32 %v589, 0.5
      %v815 = vmul.f32 %v590, 0.5
      %v816 = vmul.f32 %v591, 0.5
      %v817 = vmul.f32 %v592, 0.5
      %v818 = vmul.f32 %v593, 0.5
      %v819 = vmul.f32 %v594, 0.5
      %v820 = vmul.f32 %v595, 0.5
      %v821 = vmul.f32 %v596, 0.5
      %v822 = vmul.f32 %v597, 0.5
      %v823 = vmul.f32 %v598, 0.5
      %v824 = vmul.f32 %v599, 0.5
      %v825 = vmul.f32 %v600, 0.5
      %v826 = vmul.f32 %v601, 0.5
      %v827 = vmul.f32 %v602, 0.5
      %v828 = vmul.f32 %v603, 0.5
      %v829 = vtanh.pop %v813
      %v830 = vtanh.pop %v814
      %v831 = vtanh.pop %v815
      %v832 = vtanh.pop %v816
      %v833 = vtanh.pop %v817
      %v834 = vtanh.pop %v818
      %v835 = vtanh.pop %v819
      %v836 = vtanh.pop %v820
      %v837 = vtanh.pop %v821
      %v838 = vtanh.pop %v822
      %v839 = vtanh.pop %v823
      %v840 = vtanh.pop %v824
      %v841 = vtanh.pop %v825
      %v842 = vtanh.pop %v826
      %v843 = vtanh.pop %v827
      %v844 = vtanh.pop %v828
      %v845 = vadd.f32 %v829, 1.0
      %v846 = vadd.f32 %v830, 1.0
      %v847 = vadd.f32 %v831, 1.0
      %v848 = vadd.f32 %v832, 1.0
      %v849 = vadd.f32 %v833, 1.0
      %v850 = vadd.f32 %v834, 1.0
      %v851 = vadd.f32 %v835, 1.0
      %v852 = vadd.f32 %v836, 1.0
      %v853 = vadd.f32 %v837, 1.0
      %v854 = vadd.f32 %v838, 1.0
      %v855 = vadd.f32 %v839, 1.0
      %v856 = vadd.f32 %v840, 1.0
      %v857 = vadd.f32 %v841, 1.0
      %v858 = vadd.f32 %v842, 1.0
      %v859 = vadd.f32 %v843, 1.0
      %v860 = vadd.f32 %v844, 1.0
      %v861 = vmul.f32 %v845, 0.5
      %v862 = vmul.f32 %v846, 0.5
      %v863 = vmul.f32 %v847, 0.5
      %v864 = vmul.f32 %v848, 0.5
      %v865 = vmul.f32 %v849, 0.5
      %v866 = vmul.f32 %v850, 0.5
      %v867 = vmul.f32 %v851, 0.5
      %v868 = vmul.f32 %v852, 0.5
      %v869 = vmul.f32 %v853, 0.5
      %v870 = vmul.f32 %v854, 0.5
      %v871 = vmul.f32 %v855, 0.5
      %v872 = vmul.f32 %v856, 0.5
      %v873 = vmul.f32 %v857, 0.5
      %v874 = vmul.f32 %v858, 0.5
      %v875 = vmul.f32 %v859, 0.5
      %v876 = vmul.f32 %v860, 0.5
      %v877 = vmul.f32 %v797, 0.5
      %v878 = vmul.f32 %v798, 0.5
      %v879 = vmul.f32 %v799, 0.5
      %v880 = vmul.f32 %v800, 0.5
      %v881 = vmul.f32 %v801, 0.5
      %v882 = vmul.f32 %v802, 0.5
      %v883 = vmul.f32 %v803, 0.5
      %v884 = vmul.f32 %v804, 0.5
      %v885 = vmul.f32 %v805, 0.5
      %v886 = vmul.f32 %v806, 0.5
      %v887 = vmul.f32 %v807, 0.5
      %v888 = vmul.f32 %v808, 0.5
      %v889 = vmul.f32 %v809, 0.5
      %v890 = vmul.f32 %v810, 0.5
      %v891 = vmul.f32 %v811, 0.5
      %v892 = vmul.f32 %v812, 0.5
      %v893 = vtanh.pop %v877
      %v894 = vtanh.pop %v878
      %v895 = vtanh.pop %v879
      %v896 = vtanh.pop %v880
      %v897 = vtanh.pop %v881
      %v898 = vtanh.pop %v882
      %v899 = vtanh.pop %v883
      %v900 = vtanh.pop %v884
      %v901 = vtanh.pop %v885
      %v902 = vtanh.pop %v886
      %v903 = vtanh.pop %v887
      %v904 = vtanh.pop %v888
      %v905 = vtanh.pop %v889
      %v906 = vtanh.pop %v890
      %v907 = vtanh.pop %v891
      %v908 = vtanh.pop %v892
      %v909 = vadd.f32 %v893, 1.0
      %v910 = vadd.f32 %v894, 1.0
      %v911 = vadd.f32 %v895, 1.0
      %v912 = vadd.f32 %v896, 1.0
      %v913 = vadd.f32 %v897, 1.0
      %v914 = vadd.f32 %v898, 1.0
      %v915 = vadd.f32 %v899, 1.0
      %v916 = vadd.f32 %v900, 1.0
      %v917 = vadd.f32 %v901, 1.0
      %v918 = vadd.f32 %v902, 1.0
      %v919 = vadd.f32 %v903, 1.0
      %v920 = vadd.f32 %v904, 1.0
      %v921 = vadd.f32 %v905, 1.0
      %v922 = vadd.f32 %v906, 1.0
      %v923 = vadd.f32 %v907, 1.0
      %v924 = vadd.f32 %v908, 1.0
      %v925 = vmul.f32 %v909, 0.5
      %v926 = vmul.f32 %v910, 0.5
      %v927 = vmul.f32 %v911, 0.5
      %v928 = vmul.f32 %v912, 0.5
      %v929 = vmul.f32 %v913, 0.5
      %v930 = vmul.f32 %v914, 0.5
      %v931 = vmul.f32 %v915, 0.5
      %v932 = vmul.f32 %v916, 0.5
      %v933 = vmul.f32 %v917, 0.5
      %v934 = vmul.f32 %v918, 0.5
      %v935 = vmul.f32 %v919, 0.5
      %v936 = vmul.f32 %v920, 0.5
      %v937 = vmul.f32 %v921, 0.5
      %v938 = vmul.f32 %v922, 0.5
      %v939 = vmul.f32 %v923, 0.5
      %v940 = vmul.f32 %v924, 0.5
      %v941 = vmul.f32 %v861, %v925
      %v942 = vmul.f32 %v862, %v926
      %v943 = vmul.f32 %v863, %v927
      %v944 = vmul.f32 %v864, %v928
      %v945 = vmul.f32 %v865, %v929
      %v946 = vmul.f32 %v866, %v930
      %v947 = vmul.f32 %v867, %v931
      %v948 = vmul.f32 %v868, %v932
      %v949 = vmul.f32 %v869, %v933
      %v950 = vmul.f32 %v870, %v934
      %v951 = vmul.f32 %v871, %v935
      %v952 = vmul.f32 %v872, %v936
      %v953 = vmul.f32 %v873, %v937
      %v954 = vmul.f32 %v874, %v938
      %v955 = vmul.f32 %v875, %v939
      %v956 = vmul.f32 %v876, %v940
      %v957 = vadd.f32 %v861, 1.0
      %v958 = vadd.f32 %v862, 1.0
      %v959 = vadd.f32 %v863, 1.0
      %v960 = vadd.f32 %v864, 1.0
      %v961 = vadd.f32 %v865, 1.0
      %v962 = vadd.f32 %v866, 1.0
      %v963 = vadd.f32 %v867, 1.0
      %v964 = vadd.f32 %v868, 1.0
      %v965 = vadd.f32 %v869, 1.0
      %v966 = vadd.f32 %v870, 1.0
      %v967 = vadd.f32 %v871, 1.0
      %v968 = vadd.f32 %v872, 1.0
      %v969 = vadd.f32 %v873, 1.0
      %v970 = vadd.f32 %v874, 1.0
      %v971 = vadd.f32 %v875, 1.0
      %v972 = vadd.f32 %v876, 1.0
      %v973 = vmul.f32 %v588, %v957
      %v974 = vmul.f32 %v589, %v958
      %v975 = vmul.f32 %v590, %v959
      %v976 = vmul.f32 %v591, %v960
      %v977 = vmul.f32 %v592, %v961
      %v978 = vmul.f32 %v593, %v962
      %v979 = vmul.f32 %v594, %v963
      %v980 = vmul.f32 %v595, %v964
      %v981 = vmul.f32 %v596, %v965
      %v982 = vmul.f32 %v597, %v966
      %v983 = vmul.f32 %v598, %v967
      %v984 = vmul.f32 %v599, %v968
      %v985 = vmul.f32 %v600, %v969
      %v986 = vmul.f32 %v601, %v970
      %v987 = vmul.f32 %v602, %v971
      %v988 = vmul.f32 %v603, %v972
      %v989 = vmul.f32 %v941, %v797
      %v990 = vmul.f32 %v942, %v798
      %v991 = vmul.f32 %v943, %v799
      %v992 = vmul.f32 %v944, %v800
      %v993 = vmul.f32 %v945, %v801
      %v994 = vmul.f32 %v946, %v802
      %v995 = vmul.f32 %v947, %v803
      %v996 = vmul.f32 %v948, %v804
      %v997 = vmul.f32 %v949, %v805
      %v998 = vmul.f32 %v950, %v806
      %v999 = vmul.f32 %v951, %v807
      %v1000 = vmul.f32 %v952, %v808
      %v1001 = vmul.f32 %v953, %v809
      %v1002 = vmul.f32 %v954, %v810
      %v1003 = vmul.f32 %v955, %v811
      %v1004 = vmul.f32 %v956, %v812
      %v1005 = vadd.f32 %v973, %v989
      %v1006 = vadd.f32 %v974, %v990
      %v1007 = vadd.f32 %v975, %v991
      %v1008 = vadd.f32 %v976, %v992
      %v1009 = vadd.f32 %v977, %v993
      %v1010 = vadd.f32 %v978, %v994
      %v1011 = vadd.f32 %v979, %v995
      %v1012 = vadd.f32 %v980, %v996
      %v1013 = vadd.f32 %v981, %v997
      %v1014 = vadd.f32 %v982, %v998
      %v1015 = vadd.f32 %v983, %v999
      %v1016 = vadd.f32 %v984, %v1000
      %v1017 = vadd.f32 %v985, %v1001
      %v1018 = vadd.f32 %v986, %v1002
      %v1019 = vadd.f32 %v987, %v1003
      %v1020 = vadd.f32 %v988, %v1004
      %v1021 = vadd.f32 %v925, 1.0
      %v1022 = vadd.f32 %v926, 1.0
      %v1023 = vadd.f32 %v927, 1.0
      %v1024 = vadd.f32 %v928, 1.0
      %v1025 = vadd.f32 %v929, 1.0
      %v1026 = vadd.f32 %v930, 1.0
      %v1027 = vadd.f32 %v931, 1.0
      %v1028 = vadd.f32 %v932, 1.0
      %v1029 = vadd.f32 %v933, 1.0
      %v1030 = vadd.f32 %v934, 1.0
      %v1031 = vadd.f32 %v935, 1.0
      %v1032 = vadd.f32 %v936, 1.0
      %v1033 = vadd.f32 %v937, 1.0
      %v1034 = vadd.f32 %v938, 1.0
      %v1035 = vadd.f32 %v939, 1.0
      %v1036 = vadd.f32 %v940, 1.0
      %v1037 = vmul.f32 %v797, %v1021
      %v1038 = vmul.f32 %v798, %v1022
      %v1039 = vmul.f32 %v799, %v1023
      %v1040 = vmul.f32 %v800, %v1024
      %v1041 = vmul.f32 %v801, %v1025
      %v1042 = vmul.f32 %v802, %v1026
      %v1043 = vmul.f32 %v803, %v1027
      %v1044 = vmul.f32 %v804, %v1028
      %v1045 = vmul.f32 %v805, %v1029
      %v1046 = vmul.f32 %v806, %v1030
      %v1047 = vmul.f32 %v807, %v1031
      %v1048 = vmul.f32 %v808, %v1032
      %v1049 = vmul.f32 %v809, %v1033
      %v1050 = vmul.f32 %v810, %v1034
      %v1051 = vmul.f32 %v811, %v1035
      %v1052 = vmul.f32 %v812, %v1036
      %v1053 = vmul.f32 %v941, %v1005
      %v1054 = vmul.f32 %v942, %v1006
      %v1055 = vmul.f32 %v943, %v1007
      %v1056 = vmul.f32 %v944, %v1008
      %v1057 = vmul.f32 %v945, %v1009
      %v1058 = vmul.f32 %v946, %v1010
      %v1059 = vmul.f32 %v947, %v1011
      %v1060 = vmul.f32 %v948, %v1012
      %v1061 = vmul.f32 %v949, %v1013
      %v1062 = vmul.f32 %v950, %v1014
      %v1063 = vmul.f32 %v951, %v1015
      %v1064 = vmul.f32 %v952, %v1016
      %v1065 = vmul.f32 %v953, %v1017
      %v1066 = vmul.f32 %v954, %v1018
      %v1067 = vmul.f32 %v955, %v1019
      %v1068 = vmul.f32 %v956, %v1020
      %v1069 = vadd.f32 %v1037, %v1053
      %v1070 = vadd.f32 %v1038, %v1054
      %v1071 = vadd.f32 %v1039, %v1055
      %v1072 = vadd.f32 %v1040, %v1056
      %v1073 = vadd.f32 %v1041, %v1057
      %v1074 = vadd.f32 %v1042, %v1058
      %v1075 = vadd.f32 %v1043, %v1059
      %v1076 = vadd.f32 %v1044, %v1060
      %v1077 = vadd.f32 %v1045, %v1061
      %v1078 = vadd.f32 %v1046, %v1062
      %v1079 = vadd.f32 %v1047, %v1063
      %v1080 = vadd.f32 %v1048, %v1064
      %v1081 = vadd.f32 %v1049, %v1065
      %v1082 = vadd.f32 %v1050, %v1066
      %v1083 = vadd.f32 %v1051, %v1067
      %v1084 = vadd.f32 %v1052, %v1068
      %1086 = vset.pattern.permute.xlu0 0
      %1087 = vperm.xlu0 %1086, %v377
      %v1088 = vpop.permute.xlu0 %1087
      %1091 = vset.pattern.permute.xlu0 0
      %1092 = vperm.xlu0 %1091, %v378
      %v1093 = vpop.permute.xlu0 %1092
      %1096 = vset.pattern.permute.xlu0 0
      %1097 = vperm.xlu0 %1096, %v379
      %v1098 = vpop.permute.xlu0 %1097
      %1101 = vset.pattern.permute.xlu0 0
      %1102 = vperm.xlu0 %1101, %v380
      %v1103 = vpop.permute.xlu0 %1102
      %1106 = vset.pattern.permute.xlu0 0
      %1107 = vperm.xlu0 %1106, %v381
      %v1108 = vpop.permute.xlu0 %1107
      %1111 = vset.pattern.permute.xlu0 0
      %1112 = vperm.xlu0 %1111, %v382
      %v1113 = vpop.permute.xlu0 %1112
      %1116 = vset.pattern.permute.xlu0 0
      %1117 = vperm.xlu0 %1116, %v383
      %v1118 = vpop.permute.xlu0 %1117
      %1121 = vset.pattern.permute.xlu0 0
      %1122 = vperm.xlu0 %1121, %v384
      %v1123 = vpop.permute.xlu0 %1122
      %v1126 = vsel %vm450, %v342, 0
      %v1129 = vsel %vm450, %v343, 0
      %v1132 = vsel %vm450, %v344, 0
      %v1135 = vsel %vm450, %v345, 0
      %v1138 = vsel %vm450, %v346, 0
      %v1141 = vsel %vm450, %v347, 0
      %v1144 = vsel %vm450, %v348, 0
      %v1147 = vsel %vm450, %v349, 0
      %1149 = vmatprep.subr.mxu0 0.0
      %1150 = vmatpush1.msra.mxu0 0.0
      %1151 = vmatprep.subr.mxu0 0.0
      %1152 = vmatpush1.msra.mxu0 0.0
      %1153 = vmatprep.subr.mxu0 0.0
      %1154 = vmatpush1.msra.mxu0 0.0
      %1155 = vmatprep.subr.mxu0 0.0
      %1156 = vmatpush1.msra.mxu0 0.0
      %1157 = vmatprep.subr.mxu0 0.0
      %1158 = vmatpush1.msra.mxu0 0.0
      %1159 = vmatprep.subr.mxu0 0.0
      %1160 = vmatpush1.msra.mxu0 0.0
      %1161 = vmatprep.subr.mxu0 0.0
      %1162 = vmatpush1.msra.mxu0 0.0
      %1163 = vmatprep.subr.mxu0 0.0
      %1164 = vmatpush1.msra.mxu0 0.0
      %1165 = vmatprep.subr.mxu0 %v1020
      %1166 = vmatpush1.msra.mxu0 %v1019
      %1167 = vmatprep.subr.mxu0 %v1018
      %1168 = vmatpush1.msra.mxu0 %v1017
      %1169 = vmatprep.subr.mxu0 %v1016
      %1170 = vmatpush1.msra.mxu0 %v1015
      %1171 = vmatprep.subr.mxu0 %v1014
      %1172 = vmatpush1.msra.mxu0 %v1013
      %1173 = vmatprep.subr.mxu0 %v1012
      %1174 = vmatpush1.msra.mxu0 %v1011
      %1175 = vmatprep.subr.mxu0 %v1010
      %1176 = vmatpush1.msra.mxu0 %v1009
      %1177 = vmatprep.subr.mxu0 %v1008
      %1178 = vmatpush1.msra.mxu0 %v1007
      %1179 = vmatprep.subr.mxu0 %v1006
      %1180 = vmatpush1.msra.mxu0 %v1005
      %1181 = vmatprep.subr.mxu0 0.0
      %1182 = vmatpush2.msra.mxu0 0.0
      %1183 = vmatprep.subr.mxu0 0.0
      %1184 = vmatpush2.msra.mxu0 0.0
      %1185 = vmatprep.subr.mxu0 0.0
      %1186 = vmatpush2.msra.mxu0 0.0
      %1187 = vmatprep.subr.mxu0 0.0
      %1188 = vmatpush2.msra.mxu0 0.0
      %1189 = vmatprep.subr.mxu0 0.0
      %1190 = vmatpush2.msra.mxu0 0.0
      %1191 = vmatprep.subr.mxu0 0.0
      %1192 = vmatpush2.msra.mxu0 0.0
      %1193 = vmatprep.subr.mxu0 0.0
      %1194 = vmatpush2.msra.mxu0 0.0
      %1195 = vmatprep.subr.mxu0 0.0
      %1196 = vmatpush2.msra.mxu0 0.0
      %1197 = vmatprep.subr.mxu0 0.0
      %1198 = vmatpush2.msra.mxu0 0.0
      %1199 = vmatprep.subr.mxu0 0.0
      %1200 = vmatpush2.msra.mxu0 0.0
      %1201 = vmatprep.subr.mxu0 0.0
      %1202 = vmatpush2.msra.mxu0 0.0
      %1203 = vmatprep.subr.mxu0 0.0
      %1204 = vmatpush2.msra.mxu0 0.0
      %1205 = vmatprep.subr.mxu0 0.0
      %1206 = vmatpush2.msra.mxu0 0.0
      %1207 = vmatprep.subr.mxu0 0.0
      %1208 = vmatpush2.msra.mxu0 0.0
      %1209 = vmatprep.subr.mxu0 0.0
      %1210 = vmatpush2.msra.mxu0 0.0
      %1211 = vmatprep.subr.mxu0 0.0
      %1212 = vmatpush2.msra.mxu0 0.0
      %1213 = vmatprep.mubr.f32.mxu0 0.0
      %1214 = vmatmul.mubr.f32.gmra.mxu0 %v1126
      %v1215 = vpop.f32.mrf.mxu0
      %v1216 = vadd.f32 %v1088, %v1215
      %v1217 = vpop.f32.mrf.mxu0
      %v1218 = vadd.f32 %v1088, %v1217
      %1219 = vmatprep.mubr.f32.mxu0 0.0
      %1220 = vmatmul.mubr.f32.gmra.mxu0 %v1129
      %v1221 = vpop.f32.mrf.mxu0
      %v1222 = vadd.f32 %v1093, %v1221
      %v1223 = vpop.f32.mrf.mxu0
      %v1224 = vadd.f32 %v1093, %v1223
      %1225 = vmatprep.mubr.f32.mxu0 0.0
      %1226 = vmatmul.mubr.f32.gmra.mxu0 %v1132
      %v1227 = vpop.f32.mrf.mxu0
      %v1228 = vadd.f32 %v1098, %v1227
      %v1229 = vpop.f32.mrf.mxu0
      %v1230 = vadd.f32 %v1098, %v1229
      %1231 = vmatprep.mubr.f32.mxu0 0.0
      %1232 = vmatmul.mubr.f32.gmra.mxu0 %v1135
      %v1233 = vpop.f32.mrf.mxu0
      %v1234 = vadd.f32 %v1103, %v1233
      %v1235 = vpop.f32.mrf.mxu0
      %v1236 = vadd.f32 %v1103, %v1235
      %1237 = vmatprep.mubr.f32.mxu0 0.0
      %1238 = vmatmul.mubr.f32.gmra.mxu0 %v1138
      %v1239 = vpop.f32.mrf.mxu0
      %v1240 = vadd.f32 %v1108, %v1239
      %v1241 = vpop.f32.mrf.mxu0
      %v1242 = vadd.f32 %v1108, %v1241
      %1243 = vmatprep.mubr.f32.mxu0 0.0
      %1244 = vmatmul.mubr.f32.gmra.mxu0 %v1141
      %v1245 = vpop.f32.mrf.mxu0
      %v1246 = vadd.f32 %v1113, %v1245
      %v1247 = vpop.f32.mrf.mxu0
      %v1248 = vadd.f32 %v1113, %v1247
      %1249 = vmatprep.mubr.f32.mxu0 0.0
      %1250 = vmatmul.mubr.f32.gmra.mxu0 %v1144
      %v1251 = vpop.f32.mrf.mxu0
      %v1252 = vadd.f32 %v1118, %v1251
      %v1253 = vpop.f32.mrf.mxu0
      %v1254 = vadd.f32 %v1118, %v1253
      %1255 = vmatprep.mubr.f32.mxu0 0.0
      %1256 = vmatmul.mubr.f32.gmra.mxu0 %v1147
      %v1257 = vpop.f32.mrf.mxu0
      %v1258 = vadd.f32 %v1123, %v1257
      %v1259 = vpop.f32.mrf.mxu0
      %v1260 = vadd.f32 %v1123, %v1259
      %1261 = vdwg.mxu0
      %v1262 = vmax.f32 %v1216, 0.0
      %v1263 = vmax.f32 %v1218, 0.0
      %v1264 = vmax.f32 %v1222, 0.0
      %v1265 = vmax.f32 %v1224, 0.0
      %v1266 = vmax.f32 %v1228, 0.0
      %v1267 = vmax.f32 %v1230, 0.0
      %v1268 = vmax.f32 %v1234, 0.0
      %v1269 = vmax.f32 %v1236, 0.0
      %v1270 = vmax.f32 %v1240, 0.0
      %v1271 = vmax.f32 %v1242, 0.0
      %v1272 = vmax.f32 %v1246, 0.0
      %v1273 = vmax.f32 %v1248, 0.0
      %v1274 = vmax.f32 %v1252, 0.0
      %v1275 = vmax.f32 %v1254, 0.0
      %v1276 = vmax.f32 %v1258, 0.0
      %v1277 = vmax.f32 %v1260, 0.0
      %1278 = vst [vmem:[%s312] sm:$0xff] %v1262
      %1279 = vst [vmem:[%s312 + $0x8] sm:$0xff] %v1263
      %1280 = vst [vmem:[%s312 + $0x10] sm:$0xff] %v1264
      %1281 = vst [vmem:[%s312 + $0x18] sm:$0xff] %v1265
      %1282 = vst [vmem:[%s312 + $0x20] sm:$0xff] %v1266
      %1283 = vst [vmem:[%s312 + $0x28] sm:$0xff] %v1267
      %1284 = vst [vmem:[%s312 + $0x30] sm:$0xff] %v1268
      %1285 = vst [vmem:[%s312 + $0x38] sm:$0xff] %v1269
      %1286 = vst [vmem:[%s312 + $0x40] sm:$0xff] %v1270
      %1287 = vst [vmem:[%s312 + $0x48] sm:$0xff] %v1271
      %1288 = vst [vmem:[%s312 + $0x50] sm:$0xff] %v1272
      %1289 = vst [vmem:[%s312 + $0x58] sm:$0xff] %v1273
      %1290 = vst [vmem:[%s312 + $0x60] sm:$0xff] %v1274
      %1291 = vst [vmem:[%s312 + $0x68] sm:$0xff] %v1275
      %1292 = vst [vmem:[%s312 + $0x70] sm:$0xff] %v1276
      %1293 = vst [vmem:[%s312 + $0x78] sm:$0xff] %v1277
      %1295 = vset.pattern.permute.xlu0 0
      %1296 = vperm.xlu0 %1295, %v386
      %v1297 = vpop.permute.xlu0 %1296
      %1300 = vset.pattern.permute.xlu0 0
      %1301 = vperm.xlu0 %1300, %v387
      %v1302 = vpop.permute.xlu0 %1301
      %1305 = vset.pattern.permute.xlu0 0
      %1306 = vperm.xlu0 %1305, %v388
      %v1307 = vpop.permute.xlu0 %1306
      %1310 = vset.pattern.permute.xlu0 0
      %1311 = vperm.xlu0 %1310, %v389
      %v1312 = vpop.permute.xlu0 %1311
      %1315 = vset.pattern.permute.xlu0 0
      %1316 = vperm.xlu0 %1315, %v390
      %v1317 = vpop.permute.xlu0 %1316
      %1320 = vset.pattern.permute.xlu0 0
      %1321 = vperm.xlu0 %1320, %v391
      %v1322 = vpop.permute.xlu0 %1321
      %1325 = vset.pattern.permute.xlu0 0
      %1326 = vperm.xlu0 %1325, %v392
      %v1327 = vpop.permute.xlu0 %1326
      %1330 = vset.pattern.permute.xlu0 0
      %1331 = vperm.xlu0 %1330, %v393
      %v1332 = vpop.permute.xlu0 %1331
      %v1335 = vsel %vm450, %v351, 0
      %v1338 = vsel %vm450, %v352, 0
      %v1341 = vsel %vm450, %v353, 0
      %v1344 = vsel %vm450, %v354, 0
      %v1347 = vsel %vm450, %v355, 0
      %v1350 = vsel %vm450, %v356, 0
      %v1353 = vsel %vm450, %v357, 0
      %v1356 = vsel %vm450, %v358, 0
      %1358 = vmatprep.subr.mxu0 0.0
      %1359 = vmatpush1.msra.mxu0 0.0
      %1360 = vmatprep.subr.mxu0 0.0
      %1361 = vmatpush1.msra.mxu0 0.0
      %1362 = vmatprep.subr.mxu0 0.0
      %1363 = vmatpush1.msra.mxu0 0.0
      %1364 = vmatprep.subr.mxu0 0.0
      %1365 = vmatpush1.msra.mxu0 0.0
      %1366 = vmatprep.subr.mxu0 0.0
      %1367 = vmatpush1.msra.mxu0 0.0
      %1368 = vmatprep.subr.mxu0 0.0
      %1369 = vmatpush1.msra.mxu0 0.0
      %1370 = vmatprep.subr.mxu0 0.0
      %1371 = vmatpush1.msra.mxu0 0.0
      %1372 = vmatprep.subr.mxu0 0.0
      %1373 = vmatpush1.msra.mxu0 0.0
      %1374 = vmatprep.subr.mxu0 %v1084
      %1375 = vmatpush1.msra.mxu0 %v1083
      %1376 = vmatprep.subr.mxu0 %v1082
      %1377 = vmatpush1.msra.mxu0 %v1081
      %1378 = vmatprep.subr.mxu0 %v1080
      %1379 = vmatpush1.msra.mxu0 %v1079
      %1380 = vmatprep.subr.mxu0 %v1078
      %1381 = vmatpush1.msra.mxu0 %v1077
      %1382 = vmatprep.subr.mxu0 %v1076
      %1383 = vmatpush1.msra.mxu0 %v1075
      %1384 = vmatprep.subr.mxu0 %v1074
      %1385 = vmatpush1.msra.mxu0 %v1073
      %1386 = vmatprep.subr.mxu0 %v1072
      %1387 = vmatpush1.msra.mxu0 %v1071
      %1388 = vmatprep.subr.mxu0 %v1070
      %1389 = vmatpush1.msra.mxu0 %v1069
      %1390 = vmatprep.subr.mxu0 0.0
      %1391 = vmatpush2.msra.mxu0 0.0
      %1392 = vmatprep.subr.mxu0 0.0
      %1393 = vmatpush2.msra.mxu0 0.0
      %1394 = vmatprep.subr.mxu0 0.0
      %1395 = vmatpush2.msra.mxu0 0.0
      %1396 = vmatprep.subr.mxu0 0.0
      %1397 = vmatpush2.msra.mxu0 0.0
      %1398 = vmatprep.subr.mxu0 0.0
      %1399 = vmatpush2.msra.mxu0 0.0
      %1400 = vmatprep.subr.mxu0 0.0
      %1401 = vmatpush2.msra.mxu0 0.0
      %1402 = vmatprep.subr.mxu0 0.0
      %1403 = vmatpush2.msra.mxu0 0.0
      %1404 = vmatprep.subr.mxu0 0.0
      %1405 = vmatpush2.msra.mxu0 0.0
      %1406 = vmatprep.subr.mxu0 0.0
      %1407 = vmatpush2.msra.mxu0 0.0
      %1408 = vmatprep.subr.mxu0 0.0
      %1409 = vmatpush2.msra.mxu0 0.0
      %1410 = vmatprep.subr.mxu0 0.0
      %1411 = vmatpush2.msra.mxu0 0.0
      %1412 = vmatprep.subr.mxu0 0.0
      %1413 = vmatpush2.msra.mxu0 0.0
      %1414 = vmatprep.subr.mxu0 0.0
      %1415 = vmatpush2.msra.mxu0 0.0
      %1416 = vmatprep.subr.mxu0 0.0
      %1417 = vmatpush2.msra.mxu0 0.0
      %1418 = vmatprep.subr.mxu0 0.0
      %1419 = vmatpush2.msra.mxu0 0.0
      %1420 = vmatprep.subr.mxu0 0.0
      %1421 = vmatpush2.msra.mxu0 0.0
      %1422 = vmatprep.mubr.f32.mxu0 0.0
      %1423 = vmatmul.mubr.f32.gmra.mxu0 %v1335
      %v1424 = vpop.f32.mrf.mxu0
      %v1425 = vadd.f32 %v1297, %v1424
      %v1426 = vpop.f32.mrf.mxu0
      %v1427 = vadd.f32 %v1297, %v1426
      %1428 = vmatprep.mubr.f32.mxu0 0.0
      %1429 = vmatmul.mubr.f32.gmra.mxu0 %v1338
      %v1430 = vpop.f32.mrf.mxu0
      %v1431 = vadd.f32 %v1302, %v1430
      %v1432 = vpop.f32.mrf.mxu0
      %v1433 = vadd.f32 %v1302, %v1432
      %1434 = vmatprep.mubr.f32.mxu0 0.0
      %1435 = vmatmul.mubr.f32.gmra.mxu0 %v1341
      %v1436 = vpop.f32.mrf.mxu0
      %v1437 = vadd.f32 %v1307, %v1436
      %v1438 = vpop.f32.mrf.mxu0
      %v1439 = vadd.f32 %v1307, %v1438
      %1440 = vmatprep.mubr.f32.mxu0 0.0
      %1441 = vmatmul.mubr.f32.gmra.mxu0 %v1344
      %v1442 = vpop.f32.mrf.mxu0
      %v1443 = vadd.f32 %v1312, %v1442
      %v1444 = vpop.f32.mrf.mxu0
      %v1445 = vadd.f32 %v1312, %v1444
      %1446 = vmatprep.mubr.f32.mxu0 0.0
      %1447 = vmatmul.mubr.f32.gmra.mxu0 %v1347
      %v1448 = vpop.f32.mrf.mxu0
      %v1449 = vadd.f32 %v1317, %v1448
      %v1450 = vpop.f32.mrf.mxu0
      %v1451 = vadd.f32 %v1317, %v1450
      %1452 = vmatprep.mubr.f32.mxu0 0.0
      %1453 = vmatmul.mubr.f32.gmra.mxu0 %v1350
      %v1454 = vpop.f32.mrf.mxu0
      %v1455 = vadd.f32 %v1322, %v1454
      %v1456 = vpop.f32.mrf.mxu0
      %v1457 = vadd.f32 %v1322, %v1456
      %1458 = vmatprep.mubr.f32.mxu0 0.0
      %1459 = vmatmul.mubr.f32.gmra.mxu0 %v1353
      %v1460 = vpop.f32.mrf.mxu0
      %v1461 = vadd.f32 %v1327, %v1460
      %v1462 = vpop.f32.mrf.mxu0
      %v1463 = vadd.f32 %v1327, %v1462
      %1464 = vmatprep.mubr.f32.mxu0 0.0
      %1465 = vmatmul.mubr.f32.gmra.mxu0 %v1356
      %v1466 = vpop.f32.mrf.mxu0
      %v1467 = vadd.f32 %v1332, %v1466
      %v1468 = vpop.f32.mrf.mxu0
      %v1469 = vadd.f32 %v1332, %v1468
      %1470 = vdwg.mxu0
      %v1471 = vmax.f32 %v1425, 0.0
      %v1472 = vmax.f32 %v1427, 0.0
      %v1473 = vmax.f32 %v1431, 0.0
      %v1474 = vmax.f32 %v1433, 0.0
      %v1475 = vmax.f32 %v1437, 0.0
      %v1476 = vmax.f32 %v1439, 0.0
      %v1477 = vmax.f32 %v1443, 0.0
      %v1478 = vmax.f32 %v1445, 0.0
      %v1479 = vmax.f32 %v1449, 0.0
      %v1480 = vmax.f32 %v1451, 0.0
      %v1481 = vmax.f32 %v1455, 0.0
      %v1482 = vmax.f32 %v1457, 0.0
      %v1483 = vmax.f32 %v1461, 0.0
      %v1484 = vmax.f32 %v1463, 0.0
      %v1485 = vmax.f32 %v1467, 0.0
      %v1486 = vmax.f32 %v1469, 0.0
      %1487 = vst [vmem:[%s322] sm:$0xff] %v1471
      %1488 = vst [vmem:[%s322 + $0x8] sm:$0xff] %v1472
      %1489 = vst [vmem:[%s322 + $0x10] sm:$0xff] %v1473
      %1490 = vst [vmem:[%s322 + $0x18] sm:$0xff] %v1474
      %1491 = vst [vmem:[%s322 + $0x20] sm:$0xff] %v1475
      %1492 = vst [vmem:[%s322 + $0x28] sm:$0xff] %v1476
      %1493 = vst [vmem:[%s322 + $0x30] sm:$0xff] %v1477
      %1494 = vst [vmem:[%s322 + $0x38] sm:$0xff] %v1478
      %1495 = vst [vmem:[%s322 + $0x40] sm:$0xff] %v1479
      %1496 = vst [vmem:[%s322 + $0x48] sm:$0xff] %v1480
      %1497 = vst [vmem:[%s322 + $0x50] sm:$0xff] %v1481
      %1498 = vst [vmem:[%s322 + $0x58] sm:$0xff] %v1482
      %1499 = vst [vmem:[%s322 + $0x60] sm:$0xff] %v1483
      %1500 = vst [vmem:[%s322 + $0x68] sm:$0xff] %v1484
      %1501 = vst [vmem:[%s322 + $0x70] sm:$0xff] %v1485
      %1502 = vst [vmem:[%s322 + $0x78] sm:$0xff] %v1486
      %s1503 = smul.u32 2, %s22
      %p1504 = scmp.lt.s32.totalorder %s21, 1
      %s1505 = scalar_select %p1504, %s21, 1
      %p1506 = scmp.lt.s32.totalorder %s1503, 1
      %s1507 = scalar_select %p1506, %s1503, 1
      %s1508 = smul.addr %s1505, 16
      %s1509 = sadd.s32 %s1507, %s1508
      %s1510 = smul.addr %s1509, 8
      %s1511 = scalar_lea.vmem %s4, %s1510
      %s1512 = smul.u32 2, %s22
      %p1513 = scmp.lt.s32.totalorder %s21, 1
      %s1514 = scalar_select %p1513, %s21, 1
      %p1515 = scmp.lt.s32.totalorder %s1512, 1
      %s1516 = scalar_select %p1515, %s1512, 1
      %s1517 = smul.addr %s1514, 16
      %s1518 = sadd.s32 %s1516, %s1517
      %s1519 = smul.addr %s1518, 8
      %s1520 = scalar_lea.vmem %s5, %s1519
      // Predicated region
      $region37: #{double_forward.1} parent=35 // pred_check
        %p1521 = pneg %p147
      $region38: #{double_forward.1} parent=35 // pred_check_branch
        %1523 = sbr.rel (%p1521) target = $region40
      $region39: #{double_forward.1} parent=35 // pred_region
        %s1524 = smul.u32 2, %s22
      $region40: #{double_forward.1} parent=35 // pred_fallthru
        _
      // Predicated region
      $region41: #{double_forward.1} parent=35 // pred_check
        %p1525 = pneg %p175
      $region42: #{double_forward.1} parent=35 // pred_check_branch
        %1527 = sbr.rel (%p1525) target = $region44
      $region43: #{double_forward.1} parent=35 // pred_region
        %s1528 = smul.u32 2, %s22
      $region44: #{double_forward.1} parent=35 // pred_fallthru
        _
    $region36: #{double_forward.1} parent=5 // pred_fallthru
      _
    %p1529 = scmp.le.s32.totalorder 2, %s12
    // Predicated region
    $region45: #{double_forward.1} parent=5 // pred_check
      %p1530 = pneg %p1529
    $region46: #{double_forward.1} parent=5 // pred_check_branch
      %1532 = sbr.rel (%p1530) target = $region48
    $region47: #{double_forward.1} parent=5 // pred_region
      %s1533 = ssub.s32 %s12, 2
      // Predicated region
      $region49: #{double_forward.1} parent=47 // pred_check
        %p1534 = pneg %p153
      $region50: #{double_forward.1} parent=47 // pred_check_branch
        %1536 = sbr.rel (%p1534) target = $region52
      $region51: #{double_forward.1} parent=47 // pred_region
        %s1537 = smul.u32 2, %s24
        %p1538 = scmp.lt.s32.totalorder %s23, 1
        %s1539 = scalar_select %p1538, %s23, 1
        %p1540 = scmp.lt.s32.totalorder %s1537, 1
        %s1541 = scalar_select %p1540, %s1537, 1
        %s1542 = smul.addr %s1539, 16
        %s1543 = sadd.s32 %s1541, %s1542
        %s1544 = smul.addr %s1543, 8
        %s1545 = scalar_lea.vmem %s4, %s1544
      $region52: #{double_forward.1} parent=47 // pred_fallthru
        _
      // Predicated region
      $region53: #{double_forward.1} parent=47 // pred_check
        %p1546 = pneg %p181
      $region54: #{double_forward.1} parent=47 // pred_check_branch
        %1548 = sbr.rel (%p1546) target = $region56
      $region55: #{double_forward.1} parent=47 // pred_region
        %s1549 = smul.u32 2, %s24
        %p1550 = scmp.lt.s32.totalorder %s23, 1
        %s1551 = scalar_select %p1550, %s23, 1
        %p1552 = scmp.lt.s32.totalorder %s1549, 1
        %s1553 = scalar_select %p1552, %s1549, 1
        %s1554 = smul.addr %s1551, 16
        %s1555 = sadd.s32 %s1553, %s1554
        %s1556 = smul.addr %s1555, 8
        %s1557 = scalar_lea.vmem %s5, %s1556
      $region56: #{double_forward.1} parent=47 // pred_fallthru
        _
    $region48: #{double_forward.1} parent=5 // pred_fallthru
      _
  $region6: #{double_forward.1} parent=0 // loop_footer
    %s16 = sadd.s32 1, %s12
  $region7: #{double_forward.1} parent=0 // loop_footer_branch
    %11 = sbr.rel target = $region3
  $region8: #{double_forward.1} parent=0 // loop_exit
    _

</llo_original>
